<compile_context>
chip_gen: v7x
topology: tpu7x:2x2x1
jax: 0.10.0
libtpu: 0.0.40
codegen_flags: <defaults>
</compile_context>

<pallas_src>
import math
import functools

import numpy as np
import jax
import jax.numpy as jnp
from jax.experimental import pallas as pl
from jax.experimental.pallas import tpu as pltpu


# ----------------------------------------------------------------------------
# "ProgressiveBandHashGrid" stand-in.
# TODO(synk): the real ProgressiveBandHashGrid (tinycudann-style multi-level
# hash-table lookup) is not defined in the provided source and has no clean
# Pallas equivalent; it is replaced by a deterministic multi-frequency
# sinusoidal encoding with the same output width (n_levels * 2 = 24 dims).
# Frequencies are capped at 2^(l % 4) * pi so f32 sin arguments stay
# well-conditioned.
# ----------------------------------------------------------------------------
_FREQ_MOD = 4


def _standin_freqs(n_levels):
    return np.asarray([(2.0 ** (l % _FREQ_MOD)) * math.pi for l in range(n_levels)],
                      dtype=np.float32)


def hash_grid_encode(x, n_output_dims=24):
    """Pure-JAX version (reference only; the kernel computes this in-place)."""
    n_levels = n_output_dims // 2
    freqs = _standin_freqs(n_levels)
    feats = []
    for l in range(n_levels):
        proj = x[:, l % 3] * freqs[l]
        feats.append(jnp.sin(proj))
        feats.append(jnp.cos(proj))
    return jnp.stack(feats, axis=-1).astype(jnp.float32)       # [N, 2L]


# ----------------------------------------------------------------------------
# Pallas kernel  (everything is [rows, TILE_N] — points on lanes)
# ----------------------------------------------------------------------------
def _center_seg_kernel(x_ref, cp_ref, dp_ref, wng_ref, w2_ref, b2_ref, mask_ref,
                       *, num_slots, comp_pad, n_levels, tau, shift_weight, hard):
    K = num_slots
    X = x_ref[...]                                              # [3, TN]

    # Single fused affine.  Row blocks (all sublane-aligned):
    #   [0          : 3*comp_pad) : rel_x | rel_y | rel_z of every slot (padded)
    #   [3*comp_pad : +2L)        : sin args | cos args (= sin args + pi/2)
    #   [...        : +H)         : A @ x + b1'   (layer-1 linear-in-x part)
    lin = (jnp.dot(cp_ref[...], X, preferred_element_type=jnp.float32)
           - dp_ref[...])                                       # [R, TN]

    rx = lin[0:K]
    ry = lin[comp_pad:comp_pad + K]
    rz = lin[2 * comp_pad:2 * comp_pad + K]
    g0 = 3 * comp_pad
    args = lin[g0:g0 + 2 * n_levels]                            # [2L, TN]
    hx = lin[g0 + 2 * n_levels:]                                # [H, TN]

    dist = rx * rx + ry * ry + rz * rz                          # [K, TN]
    nrm = jnp.sqrt(dist)                                        # [K, TN]
    gfeat = jnp.sin(args)                                       # [2L, TN] (sin | cos)

    ng = jnp.concatenate([gfeat, nrm], axis=0)                  # [2L + K, TN]
    h = hx + jnp.dot(wng_ref[...], ng, preferred_element_type=jnp.float32)
    h = jnp.maximum(h, 0.0)                                     # ReLU  [H, TN]

    delta = (jnp.dot(w2_ref[...], h, preferred_element_type=jnp.float32)
             + b2_ref[...])                                     # [2*comp_pad, TN]
    ls = delta[0:K]                                             # logscale head
    sh = delta[comp_pad:comp_pad + K]                           # shift head

    dist = dist * jnp.exp(shift_weight * ls)
    logits = -dist + shift_weight * sh                          # [K, TN]

    if hard:
        # Forward value of the straight-through hard one-hot (softmax skipped).
        # torch.argmax semantics: first index wins on exact ties.
        mx = jnp.max(logits, axis=0, keepdims=True)
        idx = jax.lax.broadcasted_iota(jnp.int32, logits.shape, 0)
        cand = jnp.where(logits >= mx, idx, jnp.int32(K))
        first = jnp.min(cand, axis=0, keepdims=True)
        y = (idx == first).astype(jnp.float32)
    else:
        # gumbel_softmax with is_training=False -> tempered softmax over slots
        tau_eff = tau / (K - 1)
        z = logits * (1.0 / tau_eff)
        z = z - jnp.max(z, axis=0, keepdims=True)
        e = jnp.exp(z)
        y = e * pl.reciprocal(jnp.sum(e, axis=0, keepdims=True), approx=False)

    mask_ref[...] = y                                           # lane-dense store


# ----------------------------------------------------------------------------
# Wrapper
# ----------------------------------------------------------------------------
def _quat_to_rotmat(q):
    """q = (w, x, y, z), normalized. R @ v == quaternion_apply(q, v)."""
    w, x, y, z = q[:, 0], q[:, 1], q[:, 2], q[:, 3]
    return jnp.stack([
        jnp.stack([1 - 2 * (y * y + z * z), 2 * (x * y - w * z), 2 * (x * z + w * y)], -1),
        jnp.stack([2 * (x * y + w * z), 1 - 2 * (x * x + z * z), 2 * (y * z - w * x)], -1),
        jnp.stack([2 * (x * z - w * y), 2 * (y * z + w * x), 1 - 2 * (x * x + y * y)], -1),
    ], axis=-2)                                                 # [K, 3, 3]


def _round_up(v, m):
    return ((v + m - 1) // m) * m


def center_based_seg_forward(params, x, tau, *, is_training=False,
                             scale_factor=1.0, shift_weight=0.5, tile_n=8192):
    # TODO(synk): gumbel noise sampling for is_training=True not implemented.
    assert not is_training

    N = x.shape[0]
    K = int(params["center"].shape[0])
    W1T = params["W1T"]                                         # [dim, H]
    H = int(W1T.shape[1])
    G = int(W1T.shape[0]) - 4 * K - 3
    L = G // 2
    comp_pad = _round_up(K, 8)                                  # sublane alignment
    f32 = jnp.float32

    # ---- fold quaternion rotation + per-slot scale into one affine ---------
    q = params["rot"] / jnp.linalg.norm(params["rot"], axis=-1, keepdims=True)
    R = _quat_to_rotmat(q)                                      # [K, 3, 3]
    inv_scale = jnp.exp(-params["logscale"]) / scale_factor     # [K, 3]
    M = inv_scale[:, :, None] * R                               # rel_k = M_k x - M_k c_k
    bvec = jnp.einsum("kij,kj->ki", M, params["center"])        # [K, 3]

    M_cm = jnp.transpose(M, (1, 0, 2))                          # component-major [3, K, 3]
    b_cm = bvec.T                                               # [3, K]
    M_pad = jnp.zeros((3, comp_pad, 3), f32).at[:, :K, :].set(M_cm)
    b_pad = jnp.zeros((3, comp_pad), f32).at[:, :K].set(b_cm)
    Mstack = M_pad.reshape(3 * comp_pad, 3)
    Bstack = b_pad.reshape(3 * comp_pad)

    # ---- regroup W1 columns to match kernel feature layout ------------------
    w1x = W1T[0:4 * K:4].T                                      # [H, K]
    w1y = W1T[1:4 * K:4].T
    w1z = W1T[2:4 * K:4].T
    w1n = W1T[3:4 * K:4].T                                      # [H, K]
    w1g = W1T[4 * K:4 * K + G]                                  # [G, H] (sin/cos interleaved)
    w1p = W1T[4 * K + G:].T                                     # [H, 3]
    b1 = params["b1"]                                           # [H]

    w1rel = jnp.concatenate([w1x, w1y, w1z], axis=1)            # [H, 3K] component-major
    M_unpad = M_cm.reshape(3 * K, 3)
    B_unpad = b_cm.reshape(3 * K)
    A = w1rel @ M_unpad + w1p                                   # [H, 3]
    b1p = b1 - w1rel @ B_unpad                                  # [H]

    freqs = _standin_freqs(L)
    P = np.zeros((L, 3), np.float32)
    for l in range(L):
        P[l, l % 3] = freqs[l]
    P = jnp.asarray(P)

    Cp = jnp.concatenate([Mstack, P, P, A], axis=0).astype(f32)             # [R, 3]
    Dp = jnp.concatenate([Bstack,
                          jnp.zeros((L,), f32),
                          jnp.full((L,), -math.pi / 2, f32),
                          -b1p], axis=0).astype(f32)[:, None]               # [R, 1]

    w1g_sin = w1g[0::2].T                                       # [H, L]
    w1g_cos = w1g[1::2].T                                       # [H, L]
    Wng = jnp.concatenate([w1g_sin, w1g_cos, w1n], axis=1).astype(f32)      # [H, 2L+K]

    W2t = params["W2T"].T                                       # [2K, H]
    b2 = params["b2"]                                           # [2K]
    W2p = (jnp.zeros((2 * comp_pad, H), f32)
           .at[0:K].set(W2t[0:K])
           .at[comp_pad:comp_pad + K].set(W2t[K:2 * K]))
    b2p = (jnp.zeros((2 * comp_pad,), f32)
           .at[0:K].set(b2[0:K])
           .at[comp_pad:comp_pad + K].set(b2[K:2 * K]))[:, None]

    # ---- tiling: points on lanes, pad N to a multiple of the tile -----------
    # Large default tile (8192 lanes) amortizes per-step overhead; intermediate
    # [R, tile] f32 slabs stay well under the scoped-VMEM limit.
    tile = _round_up(min(int(tile_n), _round_up(max(N, 1), 128)), 128)
    n_pad = _round_up(N, tile)
    x_t = jnp.pad(x.astype(f32).T, ((0, 0), (0, n_pad - N)))    # [3, n_pad]

    hard = bool(tau - 0.1 < 0.001)
    kernel = functools.partial(
        _center_seg_kernel, num_slots=K, comp_pad=comp_pad, n_levels=L,
        tau=float(tau), shift_weight=float(shift_weight), hard=hard)

    const = lambda arr: pl.BlockSpec(arr.shape, lambda i: (0, 0))
    mask_t = pl.pallas_call(
        kernel,
        out_shape=jax.ShapeDtypeStruct((K, n_pad), f32),
        grid_spec=pltpu.PrefetchScalarGridSpec(
            num_scalar_prefetch=0,
            grid=(n_pad // tile,),
            in_specs=[
                pl.BlockSpec((3, tile), lambda i: (0, i)),      # x^T tile
                const(Cp), const(Dp), const(Wng), const(W2p), const(b2p),
            ],
            out_specs=pl.BlockSpec((K, tile), lambda i: (0, i)),
        ),
        compiler_params=pltpu.CompilerParams(
            dimension_semantics=("parallel",)),
    )(x_t, Cp, Dp, Wng, W2p, b2p)

    slots = None
    return slots, mask_t[:, :N].T                               # [N, K]


# ----------------------------------------------------------------------------
# Pure-JAX reference (mirrors the PyTorch forward) for validation
# ----------------------------------------------------------------------------
def reference_forward(params, x, tau, *, scale_factor=1.0, shift_weight=0.5):
    N = x.shape[0]
    K = params["center"].shape[0]
    center = params["center"]
    logscale = params["logscale"]
    rot = params["rot"]
    q = rot / jnp.linalg.norm(rot, axis=-1, keepdims=True)
    qw, qvec = q[:, 0:1], q[:, 1:]

    diff = x[:, None, :] - center[None]                         # [N, K, 3]
    qv = jnp.broadcast_to(qvec[None], diff.shape)
    t = 2.0 * jnp.cross(qv, diff)
    rot_pts = diff + qw[None] * t + jnp.cross(qv, t)
    rel = rot_pts / (jnp.exp(logscale)[None] * scale_factor)    # [N, K, 3]

    dist = (rel ** 2).sum(-1)                                   # [N, K]
    nrm = jnp.linalg.norm(rel, axis=-1, keepdims=True)
    x_rel = jnp.concatenate([rel, nrm], -1).reshape(N, -1)      # [N, 4K]

    G = params["W1T"].shape[0] - 4 * K - 3
    info = jnp.concatenate([x_rel, hash_grid_encode(x, G), x], -1)

    h = jnp.maximum(info @ params["W1T"] + params["b1"], 0.0)
    delta = h @ params["W2T"] + params["b2"]
    ls, sh = delta[:, :K], delta[:, K:]
    dist = dist * jnp.exp(shift_weight * ls)
    logits = -dist + sh * shift_weight
    return logits, jax.nn.softmax(logits / (tau / (K - 1)), axis=1)


# ----------------------------------------------------------------------------
# Deterministic parameter init (shapes from __init__; spreads enlarged a bit
# so the validation exercises a non-trivial rotation / non-degenerate softmax)
# ----------------------------------------------------------------------------
def init_params(key, num_slots, slot_size, grid_feat_dim=24):
    dim = num_slots * 4 + grid_feat_dim + 3
    ks = jax.random.split(key, 7)
    center = jax.random.normal(ks[0], (num_slots, 3), jnp.float32) * 0.3
    logscale = jax.random.normal(ks[1], (num_slots, 3), jnp.float32) * 0.1
    rot = (jnp.tile(jnp.array([[1.0, 0.0, 0.0, 0.0]], jnp.float32), (num_slots, 1))
           + 0.2 * jax.random.normal(ks[2], (num_slots, 4), jnp.float32))
    lim1 = 1.0 / math.sqrt(dim)
    W1T = jax.random.uniform(ks[3], (dim, slot_size), jnp.float32, -lim1, lim1)
    b1 = jax.random.uniform(ks[4], (slot_size,), jnp.float32, -lim1, lim1)
    lim2 = 1.0 / math.sqrt(slot_size)
    W2T = jax.random.uniform(ks[5], (slot_size, num_slots * 2), jnp.float32, -lim2, lim2)
    b2 = jax.random.uniform(ks[6], (num_slots * 2,), jnp.float32, -lim2, lim2)
    return dict(center=center, logscale=logscale, rot=rot,
                W1T=W1T, b1=b1, W2T=W2T, b2=b2)


if __name__ == "__main__":
    key = jax.random.PRNGKey(0)
    kp, kx = jax.random.split(key)

    num_slots, slot_size = 4, 32
    N = 500                                   # not a tile multiple -> exercises padding path
    params = init_params(kp, num_slots, slot_size, grid_feat_dim=24)
    x = jax.random.uniform(kx, (N, 3), jnp.float32, -1.0, 1.0)

    # ---- soft path (tau - 0.1 >= 0.001): tempered softmax ----
    tau = 1.0
    slots, mask = center_based_seg_forward(params, x, tau, tile_n=256)
    mask = jax.block_until_ready(mask)
    ref_logits, ref_mask = reference_forward(params, x, tau)

    assert mask.shape == (N, num_slots)
    assert bool(jnp.all(jnp.isfinite(mask)))
    assert jnp.allclose(jnp.sum(mask, axis=1), 1.0, atol=1e-4)
    err = float(jnp.max(jnp.abs(mask - ref_mask)))
    assert err < 1e-3, err

    # ---- same soft path through the default (large-tile) config ----
    _, mask_big = center_based_seg_forward(params, x, tau)
    mask_big = jax.block_until_ready(mask_big)
    assert float(jnp.max(jnp.abs(mask_big - ref_mask))) < 1e-3

    # ---- hard path (tau - 0.1 < 0.001): one-hot forward value ----
    tau_h = 0.1
    _, mask_h = center_based_seg_forward(params, x, tau_h, tile_n=256)
    mask_h = jax.block_until_ready(mask_h)
    assert jnp.allclose(jnp.sum(mask_h, axis=1), 1.0, atol=1e-6)
    assert jnp.allclose(jnp.max(mask_h, axis=1), 1.0, atol=1e-6)
    agree = float(jnp.mean((jnp.argmax(mask_h, axis=1)
                            == jnp.argmax(ref_logits, axis=1)).astype(jnp.float32)))
    assert agree > 0.99, agree

    print("KERNEL_OK")
</pallas_src>

<mosaic_0001>
module attributes {stable_mosaic.version = 11 : i64} {
  func.func @_center_seg_kernel(%arg0: i32, %arg1: memref<3x256xf32, #tpu.memory_space<vmem>>, %arg2: memref<80x3xf32, #tpu.memory_space<vmem>>, %arg3: memref<80x1xf32, #tpu.memory_space<vmem>>, %arg4: memref<32x28xf32, #tpu.memory_space<vmem>>, %arg5: memref<16x32xf32, #tpu.memory_space<vmem>>, %arg6: memref<16x1xf32, #tpu.memory_space<vmem>>, %arg7: memref<4x256xf32, #tpu.memory_space<vmem>>) attributes {dimension_semantics = [#tpu.dimension_semantics<parallel>], iteration_bounds = array<i64: 2>, scalar_prefetch = 0 : i64, scratch_operands = 0 : i64, tpu.core_type = #tpu.core_type<tc>, window_params = [{transform_indices = @transform_0, window_bounds = array<i64: 3, 256>}, {pipeline_mode = #tpu.pipeline_mode<synchronous>, transform_indices = @transform_1, window_bounds = array<i64: 80, 3>}, {pipeline_mode = #tpu.pipeline_mode<synchronous>, transform_indices = @transform_2, window_bounds = array<i64: 80, 1>}, {pipeline_mode = #tpu.pipeline_mode<synchronous>, transform_indices = @transform_3, window_bounds = array<i64: 32, 28>}, {pipeline_mode = #tpu.pipeline_mode<synchronous>, transform_indices = @transform_4, window_bounds = array<i64: 16, 32>}, {pipeline_mode = #tpu.pipeline_mode<synchronous>, transform_indices = @transform_5, window_bounds = array<i64: 16, 1>}, {transform_indices = @transform_6, window_bounds = array<i64: 4, 256>}]} {
    %c0 = arith.constant 0 : index
    %c0_0 = arith.constant 0 : index
    %0 = vector.load %arg1[%c0, %c0_0] : memref<3x256xf32, #tpu.memory_space<vmem>>, vector<3x256xf32>
    %c0_1 = arith.constant 0 : index
    %c0_2 = arith.constant 0 : index
    %1 = vector.load %arg2[%c0_1, %c0_2] : memref<80x3xf32, #tpu.memory_space<vmem>>, vector<80x3xf32>
    %cst = arith.constant dense<0.000000e+00> : vector<80x256xf32>
    %2 = tpu.matmul %1, %0, %cst {dimension_numbers = #tpu.dot_dimension_numbers<[1], [0], [0], [1], [0, 0, 1, 1], [], []>} : vector<80x3xf32>, vector<3x256xf32>, vector<80x256xf32> -> vector<80x256xf32>
    %c0_3 = arith.constant 0 : index
    %c0_4 = arith.constant 0 : index
    %3 = vector.load %arg3[%c0_3, %c0_4] : memref<80x1xf32, #tpu.memory_space<vmem>>, vector<80x1xf32>
    %4 = vector.broadcast %3 : vector<80x1xf32> to vector<80x256xf32>
    %5 = arith.subf %2, %4 : vector<80x256xf32>
    %6 = vector.extract_strided_slice %5 {offsets = [0, 0], sizes = [4, 256], strides = [1, 1]} : vector<80x256xf32> to vector<4x256xf32>
    %7 = vector.extract_strided_slice %5 {offsets = [8, 0], sizes = [4, 256], strides = [1, 1]} : vector<80x256xf32> to vector<4x256xf32>
    %8 = vector.extract_strided_slice %5 {offsets = [16, 0], sizes = [4, 256], strides = [1, 1]} : vector<80x256xf32> to vector<4x256xf32>
    %9 = vector.extract_strided_slice %5 {offsets = [24, 0], sizes = [24, 256], strides = [1, 1]} : vector<80x256xf32> to vector<24x256xf32>
    %10 = vector.extract_strided_slice %5 {offsets = [48, 0], sizes = [32, 256], strides = [1, 1]} : vector<80x256xf32> to vector<32x256xf32>
    %11 = arith.mulf %6, %6 : vector<4x256xf32>
    %12 = arith.mulf %7, %7 : vector<4x256xf32>
    %13 = arith.addf %11, %12 : vector<4x256xf32>
    %14 = arith.mulf %8, %8 : vector<4x256xf32>
    %15 = arith.addf %13, %14 : vector<4x256xf32>
    %16 = math.sqrt %15 : vector<4x256xf32>
    %17 = math.sin %9 : vector<24x256xf32>
    %18 = tpu.concatenate %17, %16 in 0 : vector<24x256xf32>, vector<4x256xf32> -> vector<28x256xf32>
    %c0_5 = arith.constant 0 : index
    %c0_6 = arith.constant 0 : index
    %19 = vector.load %arg4[%c0_5, %c0_6] : memref<32x28xf32, #tpu.memory_space<vmem>>, vector<32x28xf32>
    %cst_7 = arith.constant dense<0.000000e+00> : vector<32x256xf32>
    %20 = tpu.matmul %19, %18, %cst_7 {dimension_numbers = #tpu.dot_dimension_numbers<[1], [0], [0], [1], [0, 0, 1, 1], [], []>} : vector<32x28xf32>, vector<28x256xf32>, vector<32x256xf32> -> vector<32x256xf32>
    %21 = arith.addf %10, %20 : vector<32x256xf32>
    %cst_8 = arith.constant 0.000000e+00 : f32
    %22 = vector.broadcast %cst_8 : f32 to vector<32x256xf32>
    %23 = arith.maximumf %21, %22 : vector<32x256xf32>
    %c0_9 = arith.constant 0 : index
    %c0_10 = arith.constant 0 : index
    %24 = vector.load %arg5[%c0_9, %c0_10] : memref<16x32xf32, #tpu.memory_space<vmem>>, vector<16x32xf32>
    %cst_11 = arith.constant dense<0.000000e+00> : vector<16x256xf32>
    %25 = tpu.matmul %24, %23, %cst_11 {dimension_numbers = #tpu.dot_dimension_numbers<[1], [0], [0], [1], [0, 0, 1, 1], [], []>} : vector<16x32xf32>, vector<32x256xf32>, vector<16x256xf32> -> vector<16x256xf32>
    %c0_12 = arith.constant 0 : index
    %c0_13 = arith.constant 0 : index
    %26 = vector.load %arg6[%c0_12, %c0_13] : memref<16x1xf32, #tpu.memory_space<vmem>>, vector<16x1xf32>
    %27 = vector.broadcast %26 : vector<16x1xf32> to vector<16x256xf32>
    %28 = arith.addf %25, %27 : vector<16x256xf32>
    %29 = vector.extract_strided_slice %28 {offsets = [0, 0], sizes = [4, 256], strides = [1, 1]} : vector<16x256xf32> to vector<4x256xf32>
    %30 = vector.extract_strided_slice %28 {offsets = [8, 0], sizes = [4, 256], strides = [1, 1]} : vector<16x256xf32> to vector<4x256xf32>
    %cst_14 = arith.constant 5.000000e-01 : f32
    %31 = vector.broadcast %cst_14 : f32 to vector<4x256xf32>
    %32 = arith.mulf %31, %29 : vector<4x256xf32>
    %33 = math.exp %32 : vector<4x256xf32>
    %34 = arith.mulf %15, %33 : vector<4x256xf32>
    %cst_15 = arith.constant 0.000000e+00 : f32
    %35 = vector.broadcast %cst_15 : f32 to vector<4x256xf32>
    %36 = arith.subf %35, %34 : vector<4x256xf32>
    %cst_16 = arith.constant 5.000000e-01 : f32
    %37 = vector.broadcast %cst_16 : f32 to vector<4x256xf32>
    %38 = arith.mulf %37, %30 : vector<4x256xf32>
    %39 = arith.addf %36, %38 : vector<4x256xf32>
    %cst_17 = arith.constant 3.000000e+00 : f32
    %40 = vector.broadcast %cst_17 : f32 to vector<4x256xf32>
    %41 = arith.mulf %39, %40 : vector<4x256xf32>
    %cst_18 = arith.constant dense<0xFF800000> : vector<256xf32>
    %42 = vector.multi_reduction <maximumf>, %41, %cst_18 [0] : vector<4x256xf32> to vector<256xf32>
    %43 = vector.shape_cast %42 : vector<256xf32> to vector<1x256xf32>
    %44 = vector.broadcast %43 : vector<1x256xf32> to vector<4x256xf32>
    %45 = arith.subf %41, %44 : vector<4x256xf32>
    %46 = math.exp %45 : vector<4x256xf32>
    %cst_19 = arith.constant dense<0.000000e+00> : vector<256xf32>
    %47 = vector.multi_reduction <add>, %46, %cst_19 [0] : vector<4x256xf32> to vector<256xf32>
    %48 = vector.shape_cast %47 : vector<256xf32> to vector<1x256xf32>
    %49 = tpu.reciprocal %48 : vector<1x256xf32> -> vector<1x256xf32>
    %50 = vector.broadcast %49 : vector<1x256xf32> to vector<4x256xf32>
    %51 = arith.mulf %46, %50 : vector<4x256xf32>
    %c0_20 = arith.constant 0 : index
    %c0_21 = arith.constant 0 : index
    %52 = vector.load %arg7[%c0_20, %c0_21] : memref<4x256xf32, #tpu.memory_space<vmem>>, vector<4x256xf32>
    tpu.vector_store %arg7[%c0_20, %c0_21], %51 {strides = array<i32>} : memref<4x256xf32, #tpu.memory_space<vmem>>, vector<4x256xf32>,
    return
  }
  func.func @transform_0(%arg0: i32) -> (i32, i32) {
    %c0_i32 = arith.constant 0 : i32
    %c0_i32_0 = arith.constant 0 : i32
    return %c0_i32, %arg0 : i32, i32
  }
  func.func @transform_1(%arg0: i32) -> (i32, i32) {
    %c0_i32 = arith.constant 0 : i32
    %c0_i32_0 = arith.constant 0 : i32
    %c0_i32_1 = arith.constant 0 : i32
    return %c0_i32, %c0_i32_0 : i32, i32
  }
  func.func @transform_2(%arg0: i32) -> (i32, i32) {
    %c0_i32 = arith.constant 0 : i32
    %c0_i32_0 = arith.constant 0 : i32
    %c0_i32_1 = arith.constant 0 : i32
    return %c0_i32, %c0_i32_0 : i32, i32
  }
  func.func @transform_3(%arg0: i32) -> (i32, i32) {
    %c0_i32 = arith.constant 0 : i32
    %c0_i32_0 = arith.constant 0 : i32
    %c0_i32_1 = arith.constant 0 : i32
    return %c0_i32, %c0_i32_0 : i32, i32
  }
  func.func @transform_4(%arg0: i32) -> (i32, i32) {
    %c0_i32 = arith.constant 0 : i32
    %c0_i32_0 = arith.constant 0 : i32
    %c0_i32_1 = arith.constant 0 : i32
    return %c0_i32, %c0_i32_0 : i32, i32
  }
  func.func @transform_5(%arg0: i32) -> (i32, i32) {
    %c0_i32 = arith.constant 0 : i32
    %c0_i32_0 = arith.constant 0 : i32
    %c0_i32_1 = arith.constant 0 : i32
    return %c0_i32, %c0_i32_0 : i32, i32
  }
  func.func @transform_6(%arg0: i32) -> (i32, i32) {
    %c0_i32 = arith.constant 0 : i32
    %c0_i32_0 = arith.constant 0 : i32
    return %c0_i32, %arg0 : i32, i32
  }
}

</mosaic_0001>

<llo_original>
// kernel: tpu_custom_call.1
$region0: #{tpu_custom_call.1}
  #allocation0 [shape = 'u32[]', space=smem, size = 0x4, offset = 0x4, fixed_abs, tag = 'smem constant byte address 0x4 - core index']
  #allocation1 [shape = 'u32[144,128]{1,0:T(1,128)}', space=vmem, size = 0x12000, scoped, tag = 'internal scratch']
  %s0 = inlined_call_operand.vmem [shape: f32[3,512], index: 0, kind: input, shape index: {}]
  %s1 = inlined_call_operand.vmem [shape: f32[80,3], index: 1, kind: input, shape index: {}]
  %s2 = inlined_call_operand.vmem [shape: f32[80,1], index: 2, kind: input, shape index: {}]
  %s3 = inlined_call_operand.vmem [shape: f32[32,28], index: 3, kind: input, shape index: {}]
  %s4 = inlined_call_operand.vmem [shape: f32[16,32], index: 4, kind: input, shape index: {}]
  %s5 = inlined_call_operand.vmem [shape: f32[16,1], index: 5, kind: input, shape index: {}]
  %s6 = inlined_call_operand.hbm [shape: f32[4,512], index: 6, kind: output, shape index: {}]
  %s7 = sld [smem:[#allocation0]]
  $region57: #{tpu_custom_call.1} parent=0
    _
  %s9 = ssub.s32 1, %s7
  %s10 = scalar_select 0, %s9, %s7
  $region1: #{tpu_custom_call.1} parent=0
    #allocation2 [shape = 'u8[8192]{0}', space=vmem, size = 0x2000, scoped, tag = 'output window, operand 0']
    #allocation3 [shape = 's32[2]{0}', space=sflag, size = 0x8, scoped, tag = 'scoped memory for tpu_custom_call.1']
    %11 = vsyncpa [#allocation3], 0
    %s12 = scalar_lea.sflag [#allocation3], 1
    %13 = vsyncpa %s12, 0
    loop: start=0, step=1, limit=4
    $region2: #{tpu_custom_call.1} parent=1 // loop_pre_header
      _
    $region3: #{tpu_custom_call.1} parent=1 // loop_header
      %s15 = sphi 0, %s19
      %p16 = scmp.ge.s32.totalorder %s15, 4
      %s25 = sphi 0, %s27
      %s28 = sphi 0, %s25
      %s29 = sphi 0, %s28
      %s45 = sphi 0, %s29
      %s49 = sphi 0, %s49
      %s51 = sphi 0, %s49
      %s52 = sphi 0, %s51
      %s66 = sphi 0, %s52
      %s70 = sphi 0, %s70
      %s72 = sphi 0, %s70
      %s73 = sphi 0, %s72
      %s87 = sphi 0, %s73
      %s91 = sphi 0, %s91
      %s93 = sphi 0, %s91
      %s94 = sphi 0, %s93
      %s108 = sphi 0, %s94
      %s112 = sphi 0, %s112
      %s114 = sphi 0, %s112
      %s115 = sphi 0, %s114
      %s129 = sphi 0, %s115
      %s133 = sphi 0, %s133
      %s135 = sphi 0, %s133
      %s136 = sphi 0, %s135
      %s150 = sphi 0, %s136
      %s156 = sphi 0, %s158
      %s159 = sphi 0, %s156
      %s160 = sphi 0, %s159
      %s176 = sphi 0, %s160
    $region4: #{tpu_custom_call.1} parent=1 // loop_header_branch
      %18 = sbr.rel (%p16) target = $region8
    $region5: #{tpu_custom_call.1} parent=1 // loop_body
      %s20 = ssub.s32 %s15, 1
      %s21 = ssub.s32 %s15, 2
      %s22 = sadd.s32 %s15, 1
      %s23 = ssub.s32 %s15, %s22
      %p24 = scmp.eq.s32.totalorder %s23, 0
      %s26 = sadd.s32 %s25, 1
      %s27 = scalar_select %p24, %s25, %s26
      %p30 = pneg %p24
      %p31 = scmp.eq.s32.totalorder %s15, 1
      %p32 = por %p30, %p31
      %p33 = scmp.ne.s32.totalorder %s25, %s28
      %p34 = scmp.eq.s32.totalorder %s15, 0
      %p35 = por %p33, %p34
      %p36 = scmp.ne.s32.totalorder %s25, %s28
      %p37 = scmp.eq.s32.totalorder %s20, 1
      %p38 = por %p36, %p37
      %p39 = scmp.ne.s32.totalorder %s28, %s29
      %p40 = scmp.eq.s32.totalorder %s20, 0
      %p41 = por %p39, %p40
      %p42 = scmp.ne.s32.totalorder %s28, %s29
      %p43 = scmp.eq.s32.totalorder %s21, 1
      %p44 = por %p42, %p43
      %p46 = scmp.ne.s32.totalorder %s29, %s45
      %p47 = scmp.eq.s32.totalorder %s21, 0
      %p48 = por %p46, %p47
      %s50 = sadd.s32 %s49, 1
      %p53 = scmp.eq.s32.totalorder %s15, 1
      %p54 = scmp.ne.s32.totalorder %s49, %s51
      %p55 = scmp.eq.s32.totalorder %s15, 0
      %p56 = por %p54, %p55
      %p57 = scmp.ne.s32.totalorder %s49, %s51
      %p58 = scmp.eq.s32.totalorder %s20, 1
      %p59 = por %p57, %p58
      %p60 = scmp.ne.s32.totalorder %s51, %s52
      %p61 = scmp.eq.s32.totalorder %s20, 0
      %p62 = por %p60, %p61
      %p63 = scmp.ne.s32.totalorder %s51, %s52
      %p64 = scmp.eq.s32.totalorder %s21, 1
      %p65 = por %p63, %p64
      %p67 = scmp.ne.s32.totalorder %s52, %s66
      %p68 = scmp.eq.s32.totalorder %s21, 0
      %p69 = por %p67, %p68
      %s71 = sadd.s32 %s70, 1
      %p74 = scmp.eq.s32.totalorder %s15, 1
      %p75 = scmp.ne.s32.totalorder %s70, %s72
      %p76 = scmp.eq.s32.totalorder %s15, 0
      %p77 = por %p75, %p76
      %p78 = scmp.ne.s32.totalorder %s70, %s72
      %p79 = scmp.eq.s32.totalorder %s20, 1
      %p80 = por %p78, %p79
      %p81 = scmp.ne.s32.totalorder %s72, %s73
      %p82 = scmp.eq.s32.totalorder %s20, 0
      %p83 = por %p81, %p82
      %p84 = scmp.ne.s32.totalorder %s72, %s73
      %p85 = scmp.eq.s32.totalorder %s21, 1
      %p86 = por %p84, %p85
      %p88 = scmp.ne.s32.totalorder %s73, %s87
      %p89 = scmp.eq.s32.totalorder %s21, 0
      %p90 = por %p88, %p89
      %s92 = sadd.s32 %s91, 1
      %p95 = scmp.eq.s32.totalorder %s15, 1
      %p96 = scmp.ne.s32.totalorder %s91, %s93
      %p97 = scmp.eq.s32.totalorder %s15, 0
      %p98 = por %p96, %p97
      %p99 = scmp.ne.s32.totalorder %s91, %s93
      %p100 = scmp.eq.s32.totalorder %s20, 1
      %p101 = por %p99, %p100
      %p102 = scmp.ne.s32.totalorder %s93, %s94
      %p103 = scmp.eq.s32.totalorder %s20, 0
      %p104 = por %p102, %p103
      %p105 = scmp.ne.s32.totalorder %s93, %s94
      %p106 = scmp.eq.s32.totalorder %s21, 1
      %p107 = por %p105, %p106
      %p109 = scmp.ne.s32.totalorder %s94, %s108
      %p110 = scmp.eq.s32.totalorder %s21, 0
      %p111 = por %p109, %p110
      %s113 = sadd.s32 %s112, 1
      %p116 = scmp.eq.s32.totalorder %s15, 1
      %p117 = scmp.ne.s32.totalorder %s112, %s114
      %p118 = scmp.eq.s32.totalorder %s15, 0
      %p119 = por %p117, %p118
      %p120 = scmp.ne.s32.totalorder %s112, %s114
      %p121 = scmp.eq.s32.totalorder %s20, 1
      %p122 = por %p120, %p121
      %p123 = scmp.ne.s32.totalorder %s114, %s115
      %p124 = scmp.eq.s32.totalorder %s20, 0
      %p125 = por %p123, %p124
      %p126 = scmp.ne.s32.totalorder %s114, %s115
      %p127 = scmp.eq.s32.totalorder %s21, 1
      %p128 = por %p126, %p127
      %p130 = scmp.ne.s32.totalorder %s115, %s129
      %p131 = scmp.eq.s32.totalorder %s21, 0
      %p132 = por %p130, %p131
      %s134 = sadd.s32 %s133, 1
      %p137 = scmp.eq.s32.totalorder %s15, 1
      %p138 = scmp.ne.s32.totalorder %s133, %s135
      %p139 = scmp.eq.s32.totalorder %s15, 0
      %p140 = por %p138, %p139
      %p141 = scmp.ne.s32.totalorder %s133, %s135
      %p142 = scmp.eq.s32.totalorder %s20, 1
      %p143 = por %p141, %p142
      %p144 = scmp.ne.s32.totalorder %s135, %s136
      %p145 = scmp.eq.s32.totalorder %s20, 0
      %p146 = por %p144, %p145
      %p147 = scmp.ne.s32.totalorder %s135, %s136
      %p148 = scmp.eq.s32.totalorder %s21, 1
      %p149 = por %p147, %p148
      %p151 = scmp.ne.s32.totalorder %s136, %s150
      %p152 = scmp.eq.s32.totalorder %s21, 0
      %p153 = por %p151, %p152
      %s154 = ssub.s32 %s15, %s22
      %p155 = scmp.eq.s32.totalorder %s154, 0
      %s157 = sadd.s32 %s156, 1
      %s158 = scalar_select %p155, %s156, %s157
      %p161 = pneg %p155
      %p162 = scmp.eq.s32.totalorder %s15, 1
      %p163 = por %p161, %p162
      %p164 = scmp.ne.s32.totalorder %s156, %s159
      %p165 = scmp.eq.s32.totalorder %s15, 0
      %p166 = por %p164, %p165
      %p167 = scmp.ne.s32.totalorder %s156, %s159
      %p168 = scmp.eq.s32.totalorder %s20, 1
      %p169 = por %p167, %p168
      %p170 = scmp.ne.s32.totalorder %s159, %s160
      %p171 = scmp.eq.s32.totalorder %s20, 0
      %p172 = por %p170, %p171
      %p173 = scmp.ne.s32.totalorder %s159, %s160
      %p174 = scmp.eq.s32.totalorder %s21, 1
      %p175 = por %p173, %p174
      %p177 = scmp.ne.s32.totalorder %s160, %s176
      %p178 = scmp.eq.s32.totalorder %s21, 0
      %p179 = por %p177, %p178
      %p180 = scmp.le.s32.totalorder 1, %s15
      %p181 = scmp.lt.s32.totalorder %s15, 3
      %p182 = pnand %p180, %p181
      %p183 = pneg %p182
      // Predicated region
      $region9: #{tpu_custom_call.1} parent=5 // pred_check
        _
      $region10: #{tpu_custom_call.1} parent=5 // pred_check_branch
        %185 = sbr.rel (%p182) target = $region12
      $region11: #{tpu_custom_call.1} parent=5 // pred_region
        %s186 = ssub.s32 %s15, 1
        // Predicated region
        $region13: #{tpu_custom_call.1} parent=11 // pred_check
          %p187 = pneg %p62
        $region14: #{tpu_custom_call.1} parent=11 // pred_check_branch
          %189 = sbr.rel (%p187) target = $region16
        $region15: #{tpu_custom_call.1} parent=11 // pred_region
          _
        $region16: #{tpu_custom_call.1} parent=11 // pred_fallthru
          _
        // Predicated region
        $region17: #{tpu_custom_call.1} parent=11 // pred_check
          %p190 = pneg %p83
        $region18: #{tpu_custom_call.1} parent=11 // pred_check_branch
          %192 = sbr.rel (%p190) target = $region20
        $region19: #{tpu_custom_call.1} parent=11 // pred_region
          _
        $region20: #{tpu_custom_call.1} parent=11 // pred_fallthru
          _
        // Predicated region
        $region21: #{tpu_custom_call.1} parent=11 // pred_check
          %p193 = pneg %p104
        $region22: #{tpu_custom_call.1} parent=11 // pred_check_branch
          %195 = sbr.rel (%p193) target = $region24
        $region23: #{tpu_custom_call.1} parent=11 // pred_region
          _
        $region24: #{tpu_custom_call.1} parent=11 // pred_fallthru
          _
        // Predicated region
        $region25: #{tpu_custom_call.1} parent=11 // pred_check
          %p196 = pneg %p125
        $region26: #{tpu_custom_call.1} parent=11 // pred_check_branch
          %198 = sbr.rel (%p196) target = $region28
        $region27: #{tpu_custom_call.1} parent=11 // pred_region
          _
        $region28: #{tpu_custom_call.1} parent=11 // pred_fallthru
          _
        // Predicated region
        $region29: #{tpu_custom_call.1} parent=11 // pred_check
          %p199 = pneg %p146
        $region30: #{tpu_custom_call.1} parent=11 // pred_check_branch
          %201 = sbr.rel (%p199) target = $region32
        $region31: #{tpu_custom_call.1} parent=11 // pred_region
          _
        $region32: #{tpu_custom_call.1} parent=11 // pred_fallthru
          _
      $region12: #{tpu_custom_call.1} parent=5 // pred_fallthru
        _
      %p202 = scmp.lt.s32.totalorder %s15, 2
      // Predicated region
      $region33: #{tpu_custom_call.1} parent=5 // pred_check
        %p203 = pneg %p202
      $region34: #{tpu_custom_call.1} parent=5 // pred_check_branch
        %205 = sbr.rel (%p203) target = $region36
      $region35: #{tpu_custom_call.1} parent=5 // pred_region
        // Predicated region
        $region37: #{tpu_custom_call.1} parent=35 // pred_check
          %p206 = pneg %p35
        $region38: #{tpu_custom_call.1} parent=35 // pred_check_branch
          %208 = sbr.rel (%p206) target = $region40
        $region39: #{tpu_custom_call.1} parent=35 // pred_region
          %s209 = smul.u32 2, %s15
          %p210 = scmp.lt.s32.totalorder %s209, 3
          %s211 = scalar_select %p210, %s209, 3
          %s212 = smul.addr %s211, 4
          %s213 = scalar_lea.vmem %s0, %s212
          %s214 = smul.u32 2, %s15
        $region40: #{tpu_custom_call.1} parent=35 // pred_fallthru
          _
      $region36: #{tpu_custom_call.1} parent=5 // pred_fallthru
        _
      %p215 = scmp.le.s32.totalorder 1, %s15
      %p216 = scmp.lt.s32.totalorder %s15, 3
      %p217 = pnand %p215, %p216
      %p218 = pneg %p217
      // Predicated region
      $region41: #{tpu_custom_call.1} parent=5 // pred_check
        _
      $region42: #{tpu_custom_call.1} parent=5 // pred_check_branch
        %220 = sbr.rel (%p217) target = $region44
      $region43: #{tpu_custom_call.1} parent=5 // pred_region
        %s221 = ssub.s32 %s15, 1
        %s222 = smul.u32 2, %s20
        %p223 = scmp.lt.s32.totalorder %s222, 3
        %s224 = scalar_select %p223, %s222, 3
        %s225 = smul.addr %s224, 4
        %s226 = scalar_lea.vmem %s0, %s225
        %p227 = pneg %p41
        %p228 = pneg %p38
        %p229 = pneg %p62
        %p230 = pneg %p59
        %p231 = pneg %p83
        %p232 = pneg %p80
        %p233 = pneg %p104
        %p234 = pneg %p101
        %p235 = pneg %p125
        %p236 = pneg %p122
        %p237 = pneg %p146
        %p238 = pneg %p143
        %p239 = pneg %p172
        %p240 = pneg %p169
        %s241 = sand.u32 %s159, 1
        %s242 = scalar_lea.sflag [#allocation3], %s241
        %s243 = sand.u32 %s159, 1
        %s244 = smul.addr %s243, 8
        %s245 = scalar_lea.vmem [#allocation2], %s244
        %s246 = smul.u32 2, %s20
        %p247 = scmp.lt.s32.totalorder %s246, 3
        %s248 = scalar_select %p247, %s246, 3
        %s249 = smul.addr %s248, 4
        %s250 = scalar_lea.vmem %s0, %s249
        %s251 = smul.u32 2, %s20
        %s252 = smul.u32 2, %s20
        %v253 = vld [vmem:[%s250] sm:$0x77]
        %v254 = vld [vmem:[%s1] sm:$0xff]
        %v255 = vld [vmem:[%s1 + $0x8] sm:$0xff]
        %v256 = vld [vmem:[%s1 + $0x10] sm:$0xff]
        %v257 = vld [vmem:[%s1 + $0x18] sm:$0xff]
        %v258 = vld [vmem:[%s1 + $0x20] sm:$0xff]
        %v259 = vld [vmem:[%s1 + $0x28] sm:$0xff]
        %v260 = vld [vmem:[%s1 + $0x30] sm:$0xff]
        %v261 = vld [vmem:[%s1 + $0x38] sm:$0xff]
        %v262 = vld [vmem:[%s1 + $0x40] sm:$0xff]
        %v263 = vld [vmem:[%s1 + $0x48] sm:$0xff]
        %v265 = vcombine.high %v253, %v253
        %vm266 = vcmask 23552
        %v268 = vsel %vm266, %v254, 0
        %v271 = vsel %vm266, %v255, 0
        %v274 = vsel %vm266, %v256, 0
        %v277 = vsel %vm266, %v257, 0
        %v280 = vsel %vm266, %v258, 0
        %v283 = vsel %vm266, %v259, 0
        %v286 = vsel %vm266, %v260, 0
        %v289 = vsel %vm266, %v261, 0
        %v292 = vsel %vm266, %v262, 0
        %v295 = vsel %vm266, %v263, 0
        %vm297 = vcmask 1042432
        %v298 = vsel %vm297, %v253, 0
        %v300 = vsel %vm297, %v265, 0
        %302 = vmatprep.subr.mxu0 %v300
        %303 = vmatpush1.msra.mxu0 %v298
        %304 = vmatprep.subr.mxu0 0.0
        %305 = vmatpush1.msra.mxu0 0.0
        %306 = vmatprep.subr.mxu0 0.0
        %307 = vmatpush1.msra.mxu0 0.0
        %308 = vmatprep.subr.mxu0 0.0
        %309 = vmatpush1.msra.mxu0 0.0
        %310 = vmatprep.subr.mxu0 0.0
        %311 = vmatpush1.msra.mxu0 0.0
        %312 = vmatprep.subr.mxu0 0.0
        %313 = vmatpush1.msra.mxu0 0.0
        %314 = vmatprep.subr.mxu0 0.0
        %315 = vmatpush1.msra.mxu0 0.0
        %316 = vmatprep.subr.mxu0 0.0
        %317 = vmatpush1.msra.mxu0 0.0
        %318 = vmatprep.subr.mxu0 0.0
        %319 = vmatpush1.msra.mxu0 0.0
        %320 = vmatprep.subr.mxu0 0.0
        %321 = vmatpush1.msra.mxu0 0.0
        %322 = vmatprep.subr.mxu0 0.0
        %323 = vmatpush1.msra.mxu0 0.0
        %324 = vmatprep.subr.mxu0 0.0
        %325 = vmatpush1.msra.mxu0 0.0
        %326 = vmatprep.subr.mxu0 0.0
        %327 = vmatpush1.msra.mxu0 0.0
        %328 = vmatprep.subr.mxu0 0.0
        %329 = vmatpush1.msra.mxu0 0.0
        %330 = vmatprep.subr.mxu0 0.0
        %331 = vmatpush1.msra.mxu0 0.0
        %332 = vmatprep.subr.mxu0 0.0
        %333 = vmatpush1.msra.mxu0 0.0
        %334 = vmatprep.subr.mxu0 0.0
        %335 = vmatpush1.msra.mxu0 0.0
        %336 = vmatprep.subr.mxu0 0.0
        %337 = vmatpush1.msra.mxu0 0.0
        %338 = vmatprep.subr.mxu0 0.0
        %339 = vmatpush1.msra.mxu0 0.0
        %340 = vmatprep.subr.mxu0 0.0
        %341 = vmatpush1.msra.mxu0 0.0
        %342 = vmatprep.subr.mxu0 0.0
        %343 = vmatpush1.msra.mxu0 0.0
        %344 = vmatprep.subr.mxu0 0.0
        %345 = vmatpush1.msra.mxu0 0.0
        %346 = vmatprep.subr.mxu0 0.0
        %347 = vmatpush1.msra.mxu0 0.0
        %348 = vmatprep.subr.mxu0 0.0
        %349 = vmatpush1.msra.mxu0 0.0
        %350 = vmatprep.subr.mxu0 0.0
        %351 = vmatpush1.msra.mxu0 0.0
        %352 = vmatprep.subr.mxu0 0.0
        %353 = vmatpush1.msra.mxu0 0.0
        %354 = vmatprep.subr.mxu0 0.0
        %355 = vmatpush1.msra.mxu0 0.0
        %356 = vmatprep.subr.mxu0 0.0
        %357 = vmatpush1.msra.mxu0 0.0
        %358 = vmatprep.subr.mxu0 0.0
        %359 = vmatpush1.msra.mxu0 0.0
        %360 = vmatprep.subr.mxu0 0.0
        %361 = vmatpush1.msra.mxu0 0.0
        %362 = vmatprep.subr.mxu0 0.0
        %363 = vmatpush1.msra.mxu0 0.0
        %364 = vmatprep.subr.mxu0 0.0
        %365 = vmatpush1.msra.mxu0 0.0
        %366 = vmatprep.mubr.f32.mxu0 0.0
        %367 = vmatmul.mubr.f32.gmra.mrb[0].mxu0 %v268
        %v368 = vpop.f32.mrb[0].mxu0
        %v369 = vadd.f32 0.0, %v368
        %v370 = vpop.f32.mrb[0].mxu0
        %v371 = vadd.f32 0.0, %v370
        %372 = vmatprep.mubr.f32.mxu0 0.0
        %373 = vmatmul.mubr.f32.gmra.mrb[0].mxu0 %v271
        %v374 = vpop.f32.mrb[0].mxu0
        %v375 = vadd.f32 0.0, %v374
        %v376 = vpop.f32.mrb[0].mxu0
        %v377 = vadd.f32 0.0, %v376
        %378 = vmatprep.mubr.f32.mxu0 0.0
        %379 = vmatmul.mubr.f32.gmra.mrb[0].mxu0 %v274
        %v380 = vpop.f32.mrb[0].mxu0
        %v381 = vadd.f32 0.0, %v380
        %v382 = vpop.f32.mrb[0].mxu0
        %v383 = vadd.f32 0.0, %v382
        %384 = vmatprep.mubr.f32.mxu0 0.0
        %385 = vmatmul.mubr.f32.gmra.mrb[0].mxu0 %v277
        %v386 = vpop.f32.mrb[0].mxu0
        %v387 = vadd.f32 0.0, %v386
        %v388 = vpop.f32.mrb[0].mxu0
        %v389 = vadd.f32 0.0, %v388
        %390 = vmatprep.mubr.f32.mxu0 0.0
        %391 = vmatmul.mubr.f32.gmra.mrb[0].mxu0 %v280
        %v392 = vpop.f32.mrb[0].mxu0
        %v393 = vadd.f32 0.0, %v392
        %v394 = vpop.f32.mrb[0].mxu0
        %v395 = vadd.f32 0.0, %v394
        %396 = vmatprep.mubr.f32.mxu0 0.0
        %397 = vmatmul.mubr.f32.gmra.mrb[0].mxu0 %v283
        %v398 = vpop.f32.mrb[0].mxu0
        %v399 = vadd.f32 0.0, %v398
        %v400 = vpop.f32.mrb[0].mxu0
        %v401 = vadd.f32 0.0, %v400
        %402 = vmatprep.mubr.f32.mxu0 0.0
        %403 = vmatmul.mubr.f32.gmra.mrb[0].mxu0 %v286
        %v404 = vpop.f32.mrb[0].mxu0
        %v405 = vadd.f32 0.0, %v404
        %v406 = vpop.f32.mrb[0].mxu0
        %v407 = vadd.f32 0.0, %v406
        %408 = vmatprep.mubr.f32.mxu0 0.0
        %409 = vmatmul.mubr.f32.gmra.mrb[0].mxu0 %v289
        %v410 = vpop.f32.mrb[0].mxu0
        %v411 = vadd.f32 0.0, %v410
        %v412 = vpop.f32.mrb[0].mxu0
        %v413 = vadd.f32 0.0, %v412
        %414 = vmatprep.mubr.f32.mxu0 0.0
        %415 = vmatmul.mubr.f32.gmra.mrb[0].mxu0 %v292
        %v416 = vpop.f32.mrb[0].mxu0
        %v417 = vadd.f32 0.0, %v416
        %v418 = vpop.f32.mrb[0].mxu0
        %v419 = vadd.f32 0.0, %v418
        %420 = vmatprep.mubr.f32.mxu0 0.0
        %421 = vmatmul.mubr.f32.gmra.mrb[0].mxu0 %v295
        %v422 = vpop.f32.mrb[0].mxu0
        %v423 = vadd.f32 0.0, %v422
        %v424 = vpop.f32.mrb[0].mxu0
        %v425 = vadd.f32 0.0, %v424
        %426 = vdwg.mxu0
        %v427 = vld [vmem:[%s2] sm:$0xff]
        %v428 = vld [vmem:[%s2 + $0x8] sm:$0xff]
        %v429 = vld [vmem:[%s2 + $0x10] sm:$0xff]
        %v430 = vld [vmem:[%s2 + $0x18] sm:$0xff]
        %v431 = vld [vmem:[%s2 + $0x20] sm:$0xff]
        %v432 = vld [vmem:[%s2 + $0x28] sm:$0xff]
        %v433 = vld [vmem:[%s2 + $0x30] sm:$0xff]
        %v434 = vld [vmem:[%s2 + $0x38] sm:$0xff]
        %v435 = vld [vmem:[%s2 + $0x40] sm:$0xff]
        %v436 = vld [vmem:[%s2 + $0x48] sm:$0xff]
        %438 = vset.pattern.permute.xlu0 0
        %439 = vperm.xlu0 %438, %v427
        %v440 = vpop.permute.xlu0 %439
        %443 = vset.pattern.permute.xlu0 0
        %444 = vperm.xlu0 %443, %v428
        %v445 = vpop.permute.xlu0 %444
        %448 = vset.pattern.permute.xlu0 0
        %449 = vperm.xlu0 %448, %v429
        %v450 = vpop.permute.xlu0 %449
        %453 = vset.pattern.permute.xlu0 0
        %454 = vperm.xlu0 %453, %v430
        %v455 = vpop.permute.xlu0 %454
        %458 = vset.pattern.permute.xlu0 0
        %459 = vperm.xlu0 %458, %v431
        %v460 = vpop.permute.xlu0 %459
        %463 = vset.pattern.permute.xlu0 0
        %464 = vperm.xlu0 %463, %v432
        %v465 = vpop.permute.xlu0 %464
        %468 = vset.pattern.permute.xlu0 0
        %469 = vperm.xlu0 %468, %v433
        %v470 = vpop.permute.xlu0 %469
        %473 = vset.pattern.permute.xlu0 0
        %474 = vperm.xlu0 %473, %v434
        %v475 = vpop.permute.xlu0 %474
        %478 = vset.pattern.permute.xlu0 0
        %479 = vperm.xlu0 %478, %v435
        %v480 = vpop.permute.xlu0 %479
        %483 = vset.pattern.permute.xlu0 0
        %484 = vperm.xlu0 %483, %v436
        %v485 = vpop.permute.xlu0 %484
        %v487 = vsub.f32 %v369, %v440
        %v488 = vsub.f32 %v371, %v440
        %v489 = vsub.f32 %v375, %v445
        %v490 = vsub.f32 %v377, %v445
        %v491 = vsub.f32 %v381, %v450
        %v492 = vsub.f32 %v383, %v450
        %v493 = vsub.f32 %v387, %v455
        %v494 = vsub.f32 %v389, %v455
        %v495 = vsub.f32 %v393, %v460
        %v496 = vsub.f32 %v395, %v460
        %v497 = vsub.f32 %v399, %v465
        %v498 = vsub.f32 %v401, %v465
        %v499 = vsub.f32 %v405, %v470
        %v500 = vsub.f32 %v407, %v470
        %v501 = vsub.f32 %v411, %v475
        %v502 = vsub.f32 %v413, %v475
        %v503 = vsub.f32 %v417, %v480
        %v504 = vsub.f32 %v419, %v480
        %v505 = vsub.f32 %v423, %v485
        %v506 = vsub.f32 %v425, %v485
        %v507 = vmul.f32 %v487, %v487
        %v508 = vmul.f32 %v488, %v488
        %v509 = vmul.f32 %v489, %v489
        %v510 = vmul.f32 %v490, %v490
        %v511 = vadd.f32 %v507, %v509
        %v512 = vadd.f32 %v508, %v510
        %v513 = vmul.f32 %v491, %v491
        %v514 = vmul.f32 %v492, %v492
        %v515 = vadd.f32 %v511, %v513
        %v516 = vadd.f32 %v512, %v514
        %v517 = vrsqrt.pop %v515
        %v518 = vmul.f32 %v515, %v517
        %vm519 = vcmp.eq.f32.partialorder %v515, inf
        %v520 = vsel %vm519, %v515, %v518
        %vm521 = vcmp.eq.f32.partialorder %v515, 0.0
        %v522 = vand.u32 %v515, 2147483648
        %v523 = vsel %vm521, %v522, %v520
        %v524 = vrsqrt.pop %v516
        %v525 = vmul.f32 %v516, %v524
        %vm526 = vcmp.eq.f32.partialorder %v516, inf
        %v527 = vsel %vm526, %v516, %v525
        %vm528 = vcmp.eq.f32.partialorder %v516, 0.0
        %v529 = vand.u32 %v516, 2147483648
        %v530 = vsel %vm528, %v529, %v527
        %v531 = vand.u32 2147483647, %v493
        %vm532 = vcmp.le.f32.partialorder %v531, 0.7853982
        %vm533 = vcmp.lt.s32.totalorder %v493, 0
        %v534 = vand.u32 %v493, 2139095040
        %v535 = vshrl.u32 %v534, 23
        %v536 = vsub.s32 %v535, 127
        %v537 = vand.u32 2147483647, %v493
        %v538 = vand.u32 %v537, 8388607
        %v539 = vor.u32 %v538, 8388608
        %v540 = vsub.s32 0, %v539
        %v541 = vadd.s32 %v536, 1
        %vm542 = vcmp.gt.s32.totalorder %v541, 0
        %v543 = vsel %vm542, %v541, 0
        %v544 = vshrl.u32 %v543, 5
        %v545 = vand.u32 %v543, 31
        %v546 = vsub.s32 32, %v545
        %v547 = vshrl.u32 683565275, %v546
        %v548 = vshll.u32 683565275, %v545
        %v549 = vshrl.u32 2475754826, %v546
        %v550 = vor.u32 %v548, %v549
        %v551 = vshll.u32 2475754826, %v545
        %v552 = vshrl.u32 2131351028, %v546
        %v553 = vor.u32 %v551, %v552
        %v554 = vshll.u32 2131351028, %v545
        %v555 = vshrl.u32 2102212464, %v546
        %v556 = vor.u32 %v554, %v555
        %v557 = vshll.u32 2102212464, %v545
        %v558 = vshrl.u32 920167782, %v546
        %v559 = vor.u32 %v557, %v558
        %v560 = vshll.u32 920167782, %v545
        %v561 = vshrl.u32 1326507024, %v546
        %v562 = vor.u32 %v560, %v561
        %vm563 = vcmp.lt.s32.totalorder %v544, 1
        %vm564 = vcmp.lt.s32.totalorder %v544, 2
        %vm565 = vcmp.lt.s32.totalorder %v544, 3
        %vm566 = vcmp.lt.s32.totalorder %v544, 4
        %v567 = vsel %vm563, %v547, %v550
        %v568 = vsel %vm566, %v556, 2102212464
        %v569 = vsel %vm565, %v553, %v568
        %v570 = vsel %vm564, %v567, %v569
        %v571 = vsel %vm563, %v550, %v553
        %v572 = vsel %vm566, %v559, 920167782
        %v573 = vsel %vm565, %v556, %v572
        %v574 = vsel %vm564, %v571, %v573
        %v575 = vsel %vm563, %v553, %v556
        %v576 = vsel %vm566, %v562, 1326507024
        %v577 = vsel %vm565, %v559, %v576
        %v578 = vsel %vm564, %v575, %v577
        %v579 = vshll.u32 %v539, 8
        %v580 = vmul.u32.u64.compose %v579, %v578
        %v581 = vextract.low.u32 %v580
        %v582 = vextract.high.u32 %v580
        %v583 = vmul.u32.u64.compose %v579, %v574
        %v584 = vextract.low.u32 %v583
        %v585 = vextract.high.u32 %v583
        %v586 = vmul.u32 %v579, %v570
        %v587 = vadd.s32 %v582, %v584
        %vm588 = vc.u32 %v582, %v584
        %v589 = vadd.s32 %v585, 1
        %v590 = vsel %vm588, %v589, %v585
        %v591 = vadd.s32 %v586, %v590
        %v592 = vadd.s32 %v591, 536870912
        %v593 = vshrl.u32 %v592, 30
        %v594 = vshll.u32 %v593, 30
        %v595 = vsub.s32 %v591, %v594
        %vm596 = vcmp.lt.s32.totalorder %v595, 0
        %v597 = vsub.s32 0, %v595
        %v598 = vsel %vm596, %v597, %v595
        %v599 = vclz %v598
        %v600 = vsub.s32 %v599, 2
        %vm601 = vcmp.gt.s32.totalorder 0, %v600
        %v602 = vsel %vm601, 0, %v600
        %v603 = vsub.s32 32, %v602
        %v604 = vshll.u32 %v595, %v602
        %v605 = vshrl.u32 %v587, %v603
        %v606 = vor.u32 %v604, %v605
        %v607 = vsub.s32 4294967266, %v602
        %v608 = vadd.s32 %v607, 127
        %v609 = vshll.u32 %v608, 23
        %v610 = vor.u32 4788187, %v609
        %v611 = vand.u32 2147483647, %v610
        %v613 = vcvt.s32.f32 %v606
        %v614 = vmul.f32 %v613, %v611
        %v615 = vxor.u32 %v614, 2147483648
        %v616 = vsel %vm533, %v615, %v614
        %v617 = vsub.s32 4, %v593
        %v618 = vsel %vm533, %v617, %v593
        %v619 = vsel %vm532, %v493, %v616
        %v620 = vsel %vm532, 0, %v618
        %v621 = vcosq.f32.pop %v619
        %v622 = vsinq.f32.pop %v619
        %vm623 = vweird.f32 %v493
        %v624 = vadd.s32 %v620, 3
        %v625 = vand.u32 %v624, 3
        %vm626 = vcmp.lt.s32.totalorder %v625, 2
        %vm627 = vcmp.eq.s32.totalorder %v625, 0
        %v628 = vxor.u32 %v622, 2147483648
        %v629 = vsel %vm627, %v621, %v628
        %vm630 = vcmp.eq.s32.totalorder %v625, 2
        %v631 = vxor.u32 %v621, 2147483648
        %v632 = vsel %vm630, %v631, %v622
        %v633 = vsel %vm626, %v629, %v632
        %v634 = vsel %vm623, nan, %v633
        %v635 = vand.u32 2147483647, %v494
        %vm636 = vcmp.le.f32.partialorder %v635, 0.7853982
        %vm637 = vcmp.lt.s32.totalorder %v494, 0
        %v638 = vand.u32 %v494, 2139095040
        %v639 = vshrl.u32 %v638, 23
        %v640 = vsub.s32 %v639, 127
        %v641 = vand.u32 2147483647, %v494
        %v642 = vand.u32 %v641, 8388607
        %v643 = vor.u32 %v642, 8388608
        %v644 = vsub.s32 0, %v643
        %v645 = vadd.s32 %v640, 1
        %vm646 = vcmp.gt.s32.totalorder %v645, 0
        %v647 = vsel %vm646, %v645, 0
        %v648 = vshrl.u32 %v647, 5
        %v649 = vand.u32 %v647, 31
        %v650 = vsub.s32 32, %v649
        %v651 = vshrl.u32 683565275, %v650
        %v652 = vshll.u32 683565275, %v649
        %v653 = vshrl.u32 2475754826, %v650
        %v654 = vor.u32 %v652, %v653
        %v655 = vshll.u32 2475754826, %v649
        %v656 = vshrl.u32 2131351028, %v650
        %v657 = vor.u32 %v655, %v656
        %v658 = vshll.u32 2131351028, %v649
        %v659 = vshrl.u32 2102212464, %v650
        %v660 = vor.u32 %v658, %v659
        %v661 = vshll.u32 2102212464, %v649
        %v662 = vshrl.u32 920167782, %v650
        %v663 = vor.u32 %v661, %v662
        %v664 = vshll.u32 920167782, %v649
        %v665 = vshrl.u32 1326507024, %v650
        %v666 = vor.u32 %v664, %v665
        %vm667 = vcmp.lt.s32.totalorder %v648, 1
        %vm668 = vcmp.lt.s32.totalorder %v648, 2
        %vm669 = vcmp.lt.s32.totalorder %v648, 3
        %vm670 = vcmp.lt.s32.totalorder %v648, 4
        %v671 = vsel %vm667, %v651, %v654
        %v672 = vsel %vm670, %v660, 2102212464
        %v673 = vsel %vm669, %v657, %v672
        %v674 = vsel %vm668, %v671, %v673
        %v675 = vsel %vm667, %v654, %v657
        %v676 = vsel %vm670, %v663, 920167782
        %v677 = vsel %vm669, %v660, %v676
        %v678 = vsel %vm668, %v675, %v677
        %v679 = vsel %vm667, %v657, %v660
        %v680 = vsel %vm670, %v666, 1326507024
        %v681 = vsel %vm669, %v663, %v680
        %v682 = vsel %vm668, %v679, %v681
        %v683 = vshll.u32 %v643, 8
        %v684 = vmul.u32.u64.compose %v683, %v682
        %v685 = vextract.low.u32 %v684
        %v686 = vextract.high.u32 %v684
        %v687 = vmul.u32.u64.compose %v683, %v678
        %v688 = vextract.low.u32 %v687
        %v689 = vextract.high.u32 %v687
        %v690 = vmul.u32 %v683, %v674
        %v691 = vadd.s32 %v686, %v688
        %vm692 = vc.u32 %v686, %v688
        %v693 = vadd.s32 %v689, 1
        %v694 = vsel %vm692, %v693, %v689
        %v695 = vadd.s32 %v690, %v694
        %v696 = vadd.s32 %v695, 536870912
        %v697 = vshrl.u32 %v696, 30
        %v698 = vshll.u32 %v697, 30
        %v699 = vsub.s32 %v695, %v698
        %vm700 = vcmp.lt.s32.totalorder %v699, 0
        %v701 = vsub.s32 0, %v699
        %v702 = vsel %vm700, %v701, %v699
        %v703 = vclz %v702
        %v704 = vsub.s32 %v703, 2
        %vm705 = vcmp.gt.s32.totalorder 0, %v704
        %v706 = vsel %vm705, 0, %v704
        %v707 = vsub.s32 32, %v706
        %v708 = vshll.u32 %v699, %v706
        %v709 = vshrl.u32 %v691, %v707
        %v710 = vor.u32 %v708, %v709
        %v711 = vsub.s32 4294967266, %v706
        %v712 = vadd.s32 %v711, 127
        %v713 = vshll.u32 %v712, 23
        %v714 = vor.u32 4788187, %v713
        %v715 = vand.u32 2147483647, %v714
        %v717 = vcvt.s32.f32 %v710
        %v718 = vmul.f32 %v717, %v715
        %v719 = vxor.u32 %v718, 2147483648
        %v720 = vsel %vm637, %v719, %v718
        %v721 = vsub.s32 4, %v697
        %v722 = vsel %vm637, %v721, %v697
        %v723 = vsel %vm636, %v494, %v720
        %v724 = vsel %vm636, 0, %v722
        %v725 = vcosq.f32.pop %v723
        %v726 = vsinq.f32.pop %v723
        %vm727 = vweird.f32 %v494
        %v728 = vadd.s32 %v724, 3
        %v729 = vand.u32 %v728, 3
        %vm730 = vcmp.lt.s32.totalorder %v729, 2
        %vm731 = vcmp.eq.s32.totalorder %v729, 0
        %v732 = vxor.u32 %v726, 2147483648
        %v733 = vsel %vm731, %v725, %v732
        %vm734 = vcmp.eq.s32.totalorder %v729, 2
        %v735 = vxor.u32 %v725, 2147483648
        %v736 = vsel %vm734, %v735, %v726
        %v737 = vsel %vm730, %v733, %v736
        %v738 = vsel %vm727, nan, %v737
        %v739 = vand.u32 2147483647, %v495
        %vm740 = vcmp.le.f32.partialorder %v739, 0.7853982
        %vm741 = vcmp.lt.s32.totalorder %v495, 0
        %v742 = vand.u32 %v495, 2139095040
        %v743 = vshrl.u32 %v742, 23
        %v744 = vsub.s32 %v743, 127
        %v745 = vand.u32 2147483647, %v495
        %v746 = vand.u32 %v745, 8388607
        %v747 = vor.u32 %v746, 8388608
        %v748 = vsub.s32 0, %v747
        %v749 = vadd.s32 %v744, 1
        %vm750 = vcmp.gt.s32.totalorder %v749, 0
        %v751 = vsel %vm750, %v749, 0
        %v752 = vshrl.u32 %v751, 5
        %v753 = vand.u32 %v751, 31
        %v754 = vsub.s32 32, %v753
        %v755 = vshrl.u32 683565275, %v754
        %v756 = vshll.u32 683565275, %v753
        %v757 = vshrl.u32 2475754826, %v754
        %v758 = vor.u32 %v756, %v757
        %v759 = vshll.u32 2475754826, %v753
        %v760 = vshrl.u32 2131351028, %v754
        %v761 = vor.u32 %v759, %v760
        %v762 = vshll.u32 2131351028, %v753
        %v763 = vshrl.u32 2102212464, %v754
        %v764 = vor.u32 %v762, %v763
        %v765 = vshll.u32 2102212464, %v753
        %v766 = vshrl.u32 920167782, %v754
        %v767 = vor.u32 %v765, %v766
        %v768 = vshll.u32 920167782, %v753
        %v769 = vshrl.u32 1326507024, %v754
        %v770 = vor.u32 %v768, %v769
        %vm771 = vcmp.lt.s32.totalorder %v752, 1
        %vm772 = vcmp.lt.s32.totalorder %v752, 2
        %vm773 = vcmp.lt.s32.totalorder %v752, 3
        %vm774 = vcmp.lt.s32.totalorder %v752, 4
        %v775 = vsel %vm771, %v755, %v758
        %v776 = vsel %vm774, %v764, 2102212464
        %v777 = vsel %vm773, %v761, %v776
        %v778 = vsel %vm772, %v775, %v777
        %v779 = vsel %vm771, %v758, %v761
        %v780 = vsel %vm774, %v767, 920167782
        %v781 = vsel %vm773, %v764, %v780
        %v782 = vsel %vm772, %v779, %v781
        %v783 = vsel %vm771, %v761, %v764
        %v784 = vsel %vm774, %v770, 1326507024
        %v785 = vsel %vm773, %v767, %v784
        %v786 = vsel %vm772, %v783, %v785
        %v787 = vshll.u32 %v747, 8
        %v788 = vmul.u32.u64.compose %v787, %v786
        %v789 = vextract.low.u32 %v788
        %v790 = vextract.high.u32 %v788
        %v791 = vmul.u32.u64.compose %v787, %v782
        %v792 = vextract.low.u32 %v791
        %v793 = vextract.high.u32 %v791
        %v794 = vmul.u32 %v787, %v778
        %v795 = vadd.s32 %v790, %v792
        %vm796 = vc.u32 %v790, %v792
        %v797 = vadd.s32 %v793, 1
        %v798 = vsel %vm796, %v797, %v793
        %v799 = vadd.s32 %v794, %v798
        %v800 = vadd.s32 %v799, 536870912
        %v801 = vshrl.u32 %v800, 30
        %v802 = vshll.u32 %v801, 30
        %v803 = vsub.s32 %v799, %v802
        %vm804 = vcmp.lt.s32.totalorder %v803, 0
        %v805 = vsub.s32 0, %v803
        %v806 = vsel %vm804, %v805, %v803
        %v807 = vclz %v806
        %v808 = vsub.s32 %v807, 2
        %vm809 = vcmp.gt.s32.totalorder 0, %v808
        %v810 = vsel %vm809, 0, %v808
        %v811 = vsub.s32 32, %v810
        %v812 = vshll.u32 %v803, %v810
        %v813 = vshrl.u32 %v795, %v811
        %v814 = vor.u32 %v812, %v813
        %v815 = vsub.s32 4294967266, %v810
        %v816 = vadd.s32 %v815, 127
        %v817 = vshll.u32 %v816, 23
        %v818 = vor.u32 4788187, %v817
        %v819 = vand.u32 2147483647, %v818
        %v821 = vcvt.s32.f32 %v814
        %v822 = vmul.f32 %v821, %v819
        %v823 = vxor.u32 %v822, 2147483648
        %v824 = vsel %vm741, %v823, %v822
        %v825 = vsub.s32 4, %v801
        %v826 = vsel %vm741, %v825, %v801
        %v827 = vsel %vm740, %v495, %v824
        %v828 = vsel %vm740, 0, %v826
        %v829 = vcosq.f32.pop %v827
        %v830 = vsinq.f32.pop %v827
        %vm831 = vweird.f32 %v495
        %v832 = vadd.s32 %v828, 3
        %v833 = vand.u32 %v832, 3
        %vm834 = vcmp.lt.s32.totalorder %v833, 2
        %vm835 = vcmp.eq.s32.totalorder %v833, 0
        %v836 = vxor.u32 %v830, 2147483648
        %v837 = vsel %vm835, %v829, %v836
        %vm838 = vcmp.eq.s32.totalorder %v833, 2
        %v839 = vxor.u32 %v829, 2147483648
        %v840 = vsel %vm838, %v839, %v830
        %v841 = vsel %vm834, %v837, %v840
        %v842 = vsel %vm831, nan, %v841
        %v843 = vand.u32 2147483647, %v496
        %vm844 = vcmp.le.f32.partialorder %v843, 0.7853982
        %vm845 = vcmp.lt.s32.totalorder %v496, 0
        %v846 = vand.u32 %v496, 2139095040
        %v847 = vshrl.u32 %v846, 23
        %v848 = vsub.s32 %v847, 127
        %v849 = vand.u32 2147483647, %v496
        %v850 = vand.u32 %v849, 8388607
        %v851 = vor.u32 %v850, 8388608
        %v852 = vsub.s32 0, %v851
        %v853 = vadd.s32 %v848, 1
        %vm854 = vcmp.gt.s32.totalorder %v853, 0
        %v855 = vsel %vm854, %v853, 0
        %v856 = vshrl.u32 %v855, 5
        %v857 = vand.u32 %v855, 31
        %v858 = vsub.s32 32, %v857
        %v859 = vshrl.u32 683565275, %v858
        %v860 = vshll.u32 683565275, %v857
        %v861 = vshrl.u32 2475754826, %v858
        %v862 = vor.u32 %v860, %v861
        %v863 = vshll.u32 2475754826, %v857
        %v864 = vshrl.u32 2131351028, %v858
        %v865 = vor.u32 %v863, %v864
        %v866 = vshll.u32 2131351028, %v857
        %v867 = vshrl.u32 2102212464, %v858
        %v868 = vor.u32 %v866, %v867
        %v869 = vshll.u32 2102212464, %v857
        %v870 = vshrl.u32 920167782, %v858
        %v871 = vor.u32 %v869, %v870
        %v872 = vshll.u32 920167782, %v857
        %v873 = vshrl.u32 1326507024, %v858
        %v874 = vor.u32 %v872, %v873
        %vm875 = vcmp.lt.s32.totalorder %v856, 1
        %vm876 = vcmp.lt.s32.totalorder %v856, 2
        %vm877 = vcmp.lt.s32.totalorder %v856, 3
        %vm878 = vcmp.lt.s32.totalorder %v856, 4
        %v879 = vsel %vm875, %v859, %v862
        %v880 = vsel %vm878, %v868, 2102212464
        %v881 = vsel %vm877, %v865, %v880
        %v882 = vsel %vm876, %v879, %v881
        %v883 = vsel %vm875, %v862, %v865
        %v884 = vsel %vm878, %v871, 920167782
        %v885 = vsel %vm877, %v868, %v884
        %v886 = vsel %vm876, %v883, %v885
        %v887 = vsel %vm875, %v865, %v868
        %v888 = vsel %vm878, %v874, 1326507024
        %v889 = vsel %vm877, %v871, %v888
        %v890 = vsel %vm876, %v887, %v889
        %v891 = vshll.u32 %v851, 8
        %v892 = vmul.u32.u64.compose %v891, %v890
        %v893 = vextract.low.u32 %v892
        %v894 = vextract.high.u32 %v892
        %v895 = vmul.u32.u64.compose %v891, %v886
        %v896 = vextract.low.u32 %v895
        %v897 = vextract.high.u32 %v895
        %v898 = vmul.u32 %v891, %v882
        %v899 = vadd.s32 %v894, %v896
        %vm900 = vc.u32 %v894, %v896
        %v901 = vadd.s32 %v897, 1
        %v902 = vsel %vm900, %v901, %v897
        %v903 = vadd.s32 %v898, %v902
        %v904 = vadd.s32 %v903, 536870912
        %v905 = vshrl.u32 %v904, 30
        %v906 = vshll.u32 %v905, 30
        %v907 = vsub.s32 %v903, %v906
        %vm908 = vcmp.lt.s32.totalorder %v907, 0
        %v909 = vsub.s32 0, %v907
        %v910 = vsel %vm908, %v909, %v907
        %v911 = vclz %v910
        %v912 = vsub.s32 %v911, 2
        %vm913 = vcmp.gt.s32.totalorder 0, %v912
        %v914 = vsel %vm913, 0, %v912
        %v915 = vsub.s32 32, %v914
        %v916 = vshll.u32 %v907, %v914
        %v917 = vshrl.u32 %v899, %v915
        %v918 = vor.u32 %v916, %v917
        %v919 = vsub.s32 4294967266, %v914
        %v920 = vadd.s32 %v919, 127
        %v921 = vshll.u32 %v920, 23
        %v922 = vor.u32 4788187, %v921
        %v923 = vand.u32 2147483647, %v922
        %v925 = vcvt.s32.f32 %v918
        %v926 = vmul.f32 %v925, %v923
        %v927 = vxor.u32 %v926, 2147483648
        %v928 = vsel %vm845, %v927, %v926
        %v929 = vsub.s32 4, %v905
        %v930 = vsel %vm845, %v929, %v905
        %v931 = vsel %vm844, %v496, %v928
        %v932 = vsel %vm844, 0, %v930
        %v933 = vcosq.f32.pop %v931
        %v934 = vsinq.f32.pop %v931
        %vm935 = vweird.f32 %v496
        %v936 = vadd.s32 %v932, 3
        %v937 = vand.u32 %v936, 3
        %vm938 = vcmp.lt.s32.totalorder %v937, 2
        %vm939 = vcmp.eq.s32.totalorder %v937, 0
        %v940 = vxor.u32 %v934, 2147483648
        %v941 = vsel %vm939, %v933, %v940
        %vm942 = vcmp.eq.s32.totalorder %v937, 2
        %v943 = vxor.u32 %v933, 2147483648
        %v944 = vsel %vm942, %v943, %v934
        %v945 = vsel %vm938, %v941, %v944
        %v946 = vsel %vm935, nan, %v945
        %v947 = vand.u32 2147483647, %v497
        %vm948 = vcmp.le.f32.partialorder %v947, 0.7853982
        %vm949 = vcmp.lt.s32.totalorder %v497, 0
        %v950 = vand.u32 %v497, 2139095040
        %v951 = vshrl.u32 %v950, 23
        %v952 = vsub.s32 %v951, 127
        %v953 = vand.u32 2147483647, %v497
        %v954 = vand.u32 %v953, 8388607
        %v955 = vor.u32 %v954, 8388608
        %v956 = vsub.s32 0, %v955
        %v957 = vadd.s32 %v952, 1
        %vm958 = vcmp.gt.s32.totalorder %v957, 0
        %v959 = vsel %vm958, %v957, 0
        %v960 = vshrl.u32 %v959, 5
        %v961 = vand.u32 %v959, 31
        %v962 = vsub.s32 32, %v961
        %v963 = vshrl.u32 683565275, %v962
        %v964 = vshll.u32 683565275, %v961
        %v965 = vshrl.u32 2475754826, %v962
        %v966 = vor.u32 %v964, %v965
        %v967 = vshll.u32 2475754826, %v961
        %v968 = vshrl.u32 2131351028, %v962
        %v969 = vor.u32 %v967, %v968
        %v970 = vshll.u32 2131351028, %v961
        %v971 = vshrl.u32 2102212464, %v962
        %v972 = vor.u32 %v970, %v971
        %v973 = vshll.u32 2102212464, %v961
        %v974 = vshrl.u32 920167782, %v962
        %v975 = vor.u32 %v973, %v974
        %v976 = vshll.u32 920167782, %v961
        %v977 = vshrl.u32 1326507024, %v962
        %v978 = vor.u32 %v976, %v977
        %vm979 = vcmp.lt.s32.totalorder %v960, 1
        %vm980 = vcmp.lt.s32.totalorder %v960, 2
        %vm981 = vcmp.lt.s32.totalorder %v960, 3
        %vm982 = vcmp.lt.s32.totalorder %v960, 4
        %v983 = vsel %vm979, %v963, %v966
        %v984 = vsel %vm982, %v972, 2102212464
        %v985 = vsel %vm981, %v969, %v984
        %v986 = vsel %vm980, %v983, %v985
        %v987 = vsel %vm979, %v966, %v969
        %v988 = vsel %vm982, %v975, 920167782
        %v989 = vsel %vm981, %v972, %v988
        %v990 = vsel %vm980, %v987, %v989
        %v991 = vsel %vm979, %v969, %v972
        %v992 = vsel %vm982, %v978, 1326507024
        %v993 = vsel %vm981, %v975, %v992
        %v994 = vsel %vm980, %v991, %v993
        %v995 = vshll.u32 %v955, 8
        %v996 = vmul.u32.u64.compose %v995, %v994
        %v997 = vextract.low.u32 %v996
        %v998 = vextract.high.u32 %v996
        %v999 = vmul.u32.u64.compose %v995, %v990
        %v1000 = vextract.low.u32 %v999
        %v1001 = vextract.high.u32 %v999
        %v1002 = vmul.u32 %v995, %v986
        %v1003 = vadd.s32 %v998, %v1000
        %vm1004 = vc.u32 %v998, %v1000
        %v1005 = vadd.s32 %v1001, 1
        %v1006 = vsel %vm1004, %v1005, %v1001
        %v1007 = vadd.s32 %v1002, %v1006
        %v1008 = vadd.s32 %v1007, 536870912
        %v1009 = vshrl.u32 %v1008, 30
        %v1010 = vshll.u32 %v1009, 30
        %v1011 = vsub.s32 %v1007, %v1010
        %vm1012 = vcmp.lt.s32.totalorder %v1011, 0
        %v1013 = vsub.s32 0, %v1011
        %v1014 = vsel %vm1012, %v1013, %v1011
        %v1015 = vclz %v1014
        %v1016 = vsub.s32 %v1015, 2
        %vm1017 = vcmp.gt.s32.totalorder 0, %v1016
        %v1018 = vsel %vm1017, 0, %v1016
        %v1019 = vsub.s32 32, %v1018
        %v1020 = vshll.u32 %v1011, %v1018
        %v1021 = vshrl.u32 %v1003, %v1019
        %v1022 = vor.u32 %v1020, %v1021
        %v1023 = vsub.s32 4294967266, %v1018
        %v1024 = vadd.s32 %v1023, 127
        %v1025 = vshll.u32 %v1024, 23
        %v1026 = vor.u32 4788187, %v1025
        %v1027 = vand.u32 2147483647, %v1026
        %v1029 = vcvt.s32.f32 %v1022
        %v1030 = vmul.f32 %v1029, %v1027
        %v1031 = vxor.u32 %v1030, 2147483648
        %v1032 = vsel %vm949, %v1031, %v1030
        %v1033 = vsub.s32 4, %v1009
        %v1034 = vsel %vm949, %v1033, %v1009
        %v1035 = vsel %vm948, %v497, %v1032
        %v1036 = vsel %vm948, 0, %v1034
        %v1037 = vcosq.f32.pop %v1035
        %v1038 = vsinq.f32.pop %v1035
        %vm1039 = vweird.f32 %v497
        %v1040 = vadd.s32 %v1036, 3
        %v1041 = vand.u32 %v1040, 3
        %vm1042 = vcmp.lt.s32.totalorder %v1041, 2
        %vm1043 = vcmp.eq.s32.totalorder %v1041, 0
        %v1044 = vxor.u32 %v1038, 2147483648
        %v1045 = vsel %vm1043, %v1037, %v1044
        %vm1046 = vcmp.eq.s32.totalorder %v1041, 2
        %v1047 = vxor.u32 %v1037, 2147483648
        %v1048 = vsel %vm1046, %v1047, %v1038
        %v1049 = vsel %vm1042, %v1045, %v1048
        %v1050 = vsel %vm1039, nan, %v1049
        %v1051 = vand.u32 2147483647, %v498
        %vm1052 = vcmp.le.f32.partialorder %v1051, 0.7853982
        %vm1053 = vcmp.lt.s32.totalorder %v498, 0
        %v1054 = vand.u32 %v498, 2139095040
        %v1055 = vshrl.u32 %v1054, 23
        %v1056 = vsub.s32 %v1055, 127
        %v1057 = vand.u32 2147483647, %v498
        %v1058 = vand.u32 %v1057, 8388607
        %v1059 = vor.u32 %v1058, 8388608
        %v1060 = vsub.s32 0, %v1059
        %v1061 = vadd.s32 %v1056, 1
        %vm1062 = vcmp.gt.s32.totalorder %v1061, 0
        %v1063 = vsel %vm1062, %v1061, 0
        %v1064 = vshrl.u32 %v1063, 5
        %v1065 = vand.u32 %v1063, 31
        %v1066 = vsub.s32 32, %v1065
        %v1067 = vshrl.u32 683565275, %v1066
        %v1068 = vshll.u32 683565275, %v1065
        %v1069 = vshrl.u32 2475754826, %v1066
        %v1070 = vor.u32 %v1068, %v1069
        %v1071 = vshll.u32 2475754826, %v1065
        %v1072 = vshrl.u32 2131351028, %v1066
        %v1073 = vor.u32 %v1071, %v1072
        %v1074 = vshll.u32 2131351028, %v1065
        %v1075 = vshrl.u32 2102212464, %v1066
        %v1076 = vor.u32 %v1074, %v1075
        %v1077 = vshll.u32 2102212464, %v1065
        %v1078 = vshrl.u32 920167782, %v1066
        %v1079 = vor.u32 %v1077, %v1078
        %v1080 = vshll.u32 920167782, %v1065
        %v1081 = vshrl.u32 1326507024, %v1066
        %v1082 = vor.u32 %v1080, %v1081
        %vm1083 = vcmp.lt.s32.totalorder %v1064, 1
        %vm1084 = vcmp.lt.s32.totalorder %v1064, 2
        %vm1085 = vcmp.lt.s32.totalorder %v1064, 3
        %vm1086 = vcmp.lt.s32.totalorder %v1064, 4
        %v1087 = vsel %vm1083, %v1067, %v1070
        %v1088 = vsel %vm1086, %v1076, 2102212464
        %v1089 = vsel %vm1085, %v1073, %v1088
        %v1090 = vsel %vm1084, %v1087, %v1089
        %v1091 = vsel %vm1083, %v1070, %v1073
        %v1092 = vsel %vm1086, %v1079, 920167782
        %v1093 = vsel %vm1085, %v1076, %v1092
        %v1094 = vsel %vm1084, %v1091, %v1093
        %v1095 = vsel %vm1083, %v1073, %v1076
        %v1096 = vsel %vm1086, %v1082, 1326507024
        %v1097 = vsel %vm1085, %v1079, %v1096
        %v1098 = vsel %vm1084, %v1095, %v1097
        %v1099 = vshll.u32 %v1059, 8
        %v1100 = vmul.u32.u64.compose %v1099, %v1098
        %v1101 = vextract.low.u32 %v1100
        %v1102 = vextract.high.u32 %v1100
        %v1103 = vmul.u32.u64.compose %v1099, %v1094
        %v1104 = vextract.low.u32 %v1103
        %v1105 = vextract.high.u32 %v1103
        %v1106 = vmul.u32 %v1099, %v1090
        %v1107 = vadd.s32 %v1102, %v1104
        %vm1108 = vc.u32 %v1102, %v1104
        %v1109 = vadd.s32 %v1105, 1
        %v1110 = vsel %vm1108, %v1109, %v1105
        %v1111 = vadd.s32 %v1106, %v1110
        %v1112 = vadd.s32 %v1111, 536870912
        %v1113 = vshrl.u32 %v1112, 30
        %v1114 = vshll.u32 %v1113, 30
        %v1115 = vsub.s32 %v1111, %v1114
        %vm1116 = vcmp.lt.s32.totalorder %v1115, 0
        %v1117 = vsub.s32 0, %v1115
        %v1118 = vsel %vm1116, %v1117, %v1115
        %v1119 = vclz %v1118
        %v1120 = vsub.s32 %v1119, 2
        %vm1121 = vcmp.gt.s32.totalorder 0, %v1120
        %v1122 = vsel %vm1121, 0, %v1120
        %v1123 = vsub.s32 32, %v1122
        %v1124 = vshll.u32 %v1115, %v1122
        %v1125 = vshrl.u32 %v1107, %v1123
        %v1126 = vor.u32 %v1124, %v1125
        %v1127 = vsub.s32 4294967266, %v1122
        %v1128 = vadd.s32 %v1127, 127
        %v1129 = vshll.u32 %v1128, 23
        %v1130 = vor.u32 4788187, %v1129
        %v1131 = vand.u32 2147483647, %v1130
        %v1133 = vcvt.s32.f32 %v1126
        %v1134 = vmul.f32 %v1133, %v1131
        %v1135 = vxor.u32 %v1134, 2147483648
        %v1136 = vsel %vm1053, %v1135, %v1134
        %v1137 = vsub.s32 4, %v1113
        %v1138 = vsel %vm1053, %v1137, %v1113
        %v1139 = vsel %vm1052, %v498, %v1136
        %v1140 = vsel %vm1052, 0, %v1138
        %v1141 = vcosq.f32.pop %v1139
        %v1142 = vsinq.f32.pop %v1139
        %vm1143 = vweird.f32 %v498
        %v1144 = vadd.s32 %v1140, 3
        %v1145 = vand.u32 %v1144, 3
        %vm1146 = vcmp.lt.s32.totalorder %v1145, 2
        %vm1147 = vcmp.eq.s32.totalorder %v1145, 0
        %v1148 = vxor.u32 %v1142, 2147483648
        %v1149 = vsel %vm1147, %v1141, %v1148
        %vm1150 = vcmp.eq.s32.totalorder %v1145, 2
        %v1151 = vxor.u32 %v1141, 2147483648
        %v1152 = vsel %vm1150, %v1151, %v1142
        %v1153 = vsel %vm1146, %v1149, %v1152
        %v1154 = vsel %vm1143, nan, %v1153
        %v1155 = vld [vmem:[%s3] sm:$0xff]
        %v1156 = vld [vmem:[%s3 + $0x8] sm:$0xff]
        %v1157 = vld [vmem:[%s3 + $0x10] sm:$0xff]
        %v1158 = vld [vmem:[%s3 + $0x18] sm:$0xff]
        %vm1159 = vcmask 228352
        %v1161 = vsel %vm1159, %v1155, 0
        %v1164 = vsel %vm1159, %v1156, 0
        %v1167 = vsel %vm1159, %v1157, 0
        %v1170 = vsel %vm1159, %v1158, 0
        %vm1172 = vcmask 1043456
        %v1174 = vsel %vm1172, %v523, 0
        %v1177 = vsel %vm1172, %v530, 0
        %1179 = vmatprep.subr.mxu0 %v738
        %1180 = vmatpush1.msra.mxu0 %v634
        %1181 = vmatprep.subr.mxu0 %v946
        %1182 = vmatpush1.msra.mxu0 %v842
        %1183 = vmatprep.subr.mxu0 %v1154
        %1184 = vmatpush1.msra.mxu0 %v1050
        %1185 = vmatprep.subr.mxu0 %v1177
        %1186 = vmatpush1.msra.mxu0 %v1174
        %1187 = vmatprep.subr.mxu0 0.0
        %1188 = vmatpush1.msra.mxu0 0.0
        %1189 = vmatprep.subr.mxu0 0.0
        %1190 = vmatpush1.msra.mxu0 0.0
        %1191 = vmatprep.subr.mxu0 0.0
        %1192 = vmatpush1.msra.mxu0 0.0
        %1193 = vmatprep.subr.mxu0 0.0
        %1194 = vmatpush1.msra.mxu0 0.0
        %1195 = vmatprep.subr.mxu0 0.0
        %1196 = vmatpush1.msra.mxu0 0.0
        %1197 = vmatprep.subr.mxu0 0.0
        %1198 = vmatpush1.msra.mxu0 0.0
        %1199 = vmatprep.subr.mxu0 0.0
        %1200 = vmatpush1.msra.mxu0 0.0
        %1201 = vmatprep.subr.mxu0 0.0
        %1202 = vmatpush1.msra.mxu0 0.0
        %1203 = vmatprep.subr.mxu0 0.0
        %1204 = vmatpush1.msra.mxu0 0.0
        %1205 = vmatprep.subr.mxu0 0.0
        %1206 = vmatpush1.msra.mxu0 0.0
        %1207 = vmatprep.subr.mxu0 0.0
        %1208 = vmatpush1.msra.mxu0 0.0
        %1209 = vmatprep.subr.mxu0 0.0
        %1210 = vmatpush1.msra.mxu0 0.0
        %1211 = vmatprep.subr.mxu0 0.0
        %1212 = vmatpush1.msra.mxu0 0.0
        %1213 = vmatprep.subr.mxu0 0.0
        %1214 = vmatpush1.msra.mxu0 0.0
        %1215 = vmatprep.subr.mxu0 0.0
        %1216 = vmatpush1.msra.mxu0 0.0
        %1217 = vmatprep.subr.mxu0 0.0
        %1218 = vmatpush1.msra.mxu0 0.0
        %1219 = vmatprep.subr.mxu0 0.0
        %1220 = vmatpush1.msra.mxu0 0.0
        %1221 = vmatprep.subr.mxu0 0.0
        %1222 = vmatpush1.msra.mxu0 0.0
        %1223 = vmatprep.subr.mxu0 0.0
        %1224 = vmatpush1.msra.mxu0 0.0
        %1225 = vmatprep.subr.mxu0 0.0
        %1226 = vmatpush1.msra.mxu0 0.0
        %1227 = vmatprep.subr.mxu0 0.0
        %1228 = vmatpush1.msra.mxu0 0.0
        %1229 = vmatprep.subr.mxu0 0.0
        %1230 = vmatpush1.msra.mxu0 0.0
        %1231 = vmatprep.subr.mxu0 0.0
        %1232 = vmatpush1.msra.mxu0 0.0
        %1233 = vmatprep.subr.mxu0 0.0
        %1234 = vmatpush1.msra.mxu0 0.0
        %1235 = vmatprep.subr.mxu0 0.0
        %1236 = vmatpush1.msra.mxu0 0.0
        %1237 = vmatprep.subr.mxu0 0.0
        %1238 = vmatpush1.msra.mxu0 0.0
        %1239 = vmatprep.subr.mxu0 0.0
        %1240 = vmatpush1.msra.mxu0 0.0
        %1241 = vmatprep.subr.mxu0 0.0
        %1242 = vmatpush1.msra.mxu0 0.0
        %1243 = vmatprep.mubr.f32.mxu0 0.0
        %1244 = vmatmul.mubr.f32.gmra.mrb[0].mxu0 %v1161
        %v1245 = vpop.f32.mrb[0].mxu0
        %v1246 = vadd.f32 0.0, %v1245
        %v1247 = vpop.f32.mrb[0].mxu0
        %v1248 = vadd.f32 0.0, %v1247
        %1249 = vmatprep.mubr.f32.mxu0 0.0
        %1250 = vmatmul.mubr.f32.gmra.mrb[0].mxu0 %v1164
        %v1251 = vpop.f32.mrb[0].mxu0
        %v1252 = vadd.f32 0.0, %v1251
        %v1253 = vpop.f32.mrb[0].mxu0
        %v1254 = vadd.f32 0.0, %v1253
        %1255 = vmatprep.mubr.f32.mxu0 0.0
        %1256 = vmatmul.mubr.f32.gmra.mrb[0].mxu0 %v1167
        %v1257 = vpop.f32.mrb[0].mxu0
        %v1258 = vadd.f32 0.0, %v1257
        %v1259 = vpop.f32.mrb[0].mxu0
        %v1260 = vadd.f32 0.0, %v1259
        %1261 = vmatprep.mubr.f32.mxu0 0.0
        %1262 = vmatmul.mubr.f32.gmra.mrb[0].mxu0 %v1170
        %v1263 = vpop.f32.mrb[0].mxu0
        %v1264 = vadd.f32 0.0, %v1263
        %v1265 = vpop.f32.mrb[0].mxu0
        %v1266 = vadd.f32 0.0, %v1265
        %1267 = vdwg.mxu0
        %v1268 = vadd.f32 %v499, %v1246
        %v1269 = vadd.f32 %v500, %v1248
        %v1270 = vadd.f32 %v501, %v1252
        %v1271 = vadd.f32 %v502, %v1254
        %v1272 = vadd.f32 %v503, %v1258
        %v1273 = vadd.f32 %v504, %v1260
        %v1274 = vadd.f32 %v505, %v1264
        %v1275 = vadd.f32 %v506, %v1266
        %v1276 = vmax.f32 %v1268, 0.0
        %v1277 = vmax.f32 %v1269, 0.0
        %v1278 = vmax.f32 %v1270, 0.0
        %v1279 = vmax.f32 %v1271, 0.0
        %v1280 = vmax.f32 %v1272, 0.0
        %v1281 = vmax.f32 %v1273, 0.0
        %v1282 = vmax.f32 %v1274, 0.0
        %v1283 = vmax.f32 %v1275, 0.0
        %v1284 = vld [vmem:[%s4] sm:$0xff]
        %v1285 = vld [vmem:[%s4 + $0x8] sm:$0xff]
        %v1286 = vld [vmem:[%s5] sm:$0xff]
        %v1287 = vld [vmem:[%s5 + $0x8] sm:$0xff]
        %1289 = vset.pattern.permute.xlu0 0
        %1290 = vperm.xlu0 %1289, %v1286
        %v1291 = vpop.permute.xlu0 %1290
        %1294 = vset.pattern.permute.xlu0 0
        %1295 = vperm.xlu0 %1294, %v1287
        %v1296 = vpop.permute.xlu0 %1295
        %vm1298 = vcmask 261120
        %v1300 = vsel %vm1298, %v1284, 0
        %v1303 = vsel %vm1298, %v1285, 0
        %1305 = vmatprep.subr.mxu0 %v1277
        %1306 = vmatpush1.msra.mxu0 %v1276
        %1307 = vmatprep.subr.mxu0 %v1279
        %1308 = vmatpush1.msra.mxu0 %v1278
        %1309 = vmatprep.subr.mxu0 %v1281
        %1310 = vmatpush1.msra.mxu0 %v1280
        %1311 = vmatprep.subr.mxu0 %v1283
        %1312 = vmatpush1.msra.mxu0 %v1282
        %1313 = vmatprep.subr.mxu0 0.0
        %1314 = vmatpush1.msra.mxu0 0.0
        %1315 = vmatprep.subr.mxu0 0.0
        %1316 = vmatpush1.msra.mxu0 0.0
        %1317 = vmatprep.subr.mxu0 0.0
        %1318 = vmatpush1.msra.mxu0 0.0
        %1319 = vmatprep.subr.mxu0 0.0
        %1320 = vmatpush1.msra.mxu0 0.0
        %1321 = vmatprep.subr.mxu0 0.0
        %1322 = vmatpush1.msra.mxu0 0.0
        %1323 = vmatprep.subr.mxu0 0.0
        %1324 = vmatpush1.msra.mxu0 0.0
        %1325 = vmatprep.subr.mxu0 0.0
        %1326 = vmatpush1.msra.mxu0 0.0
        %1327 = vmatprep.subr.mxu0 0.0
        %1328 = vmatpush1.msra.mxu0 0.0
        %1329 = vmatprep.subr.mxu0 0.0
        %1330 = vmatpush1.msra.mxu0 0.0
        %1331 = vmatprep.subr.mxu0 0.0
        %1332 = vmatpush1.msra.mxu0 0.0
        %1333 = vmatprep.subr.mxu0 0.0
        %1334 = vmatpush1.msra.mxu0 0.0
        %1335 = vmatprep.subr.mxu0 0.0
        %1336 = vmatpush1.msra.mxu0 0.0
        %1337 = vmatprep.subr.mxu0 0.0
        %1338 = vmatpush1.msra.mxu0 0.0
        %1339 = vmatprep.subr.mxu0 0.0
        %1340 = vmatpush1.msra.mxu0 0.0
        %1341 = vmatprep.subr.mxu0 0.0
        %1342 = vmatpush1.msra.mxu0 0.0
        %1343 = vmatprep.subr.mxu0 0.0
        %1344 = vmatpush1.msra.mxu0 0.0
        %1345 = vmatprep.subr.mxu0 0.0
        %1346 = vmatpush1.msra.mxu0 0.0
        %1347 = vmatprep.subr.mxu0 0.0
        %1348 = vmatpush1.msra.mxu0 0.0
        %1349 = vmatprep.subr.mxu0 0.0
        %1350 = vmatpush1.msra.mxu0 0.0
        %1351 = vmatprep.subr.mxu0 0.0
        %1352 = vmatpush1.msra.mxu0 0.0
        %1353 = vmatprep.subr.mxu0 0.0
        %1354 = vmatpush1.msra.mxu0 0.0
        %1355 = vmatprep.subr.mxu0 0.0
        %1356 = vmatpush1.msra.mxu0 0.0
        %1357 = vmatprep.subr.mxu0 0.0
        %1358 = vmatpush1.msra.mxu0 0.0
        %1359 = vmatprep.subr.mxu0 0.0
        %1360 = vmatpush1.msra.mxu0 0.0
        %1361 = vmatprep.subr.mxu0 0.0
        %1362 = vmatpush1.msra.mxu0 0.0
        %1363 = vmatprep.subr.mxu0 0.0
        %1364 = vmatpush1.msra.mxu0 0.0
        %1365 = vmatprep.subr.mxu0 0.0
        %1366 = vmatpush1.msra.mxu0 0.0
        %1367 = vmatprep.subr.mxu0 0.0
        %1368 = vmatpush1.msra.mxu0 0.0
        %1369 = vmatprep.mubr.f32.mxu0 0.0
        %1370 = vmatmul.mubr.f32.gmra.mrb[0].mxu0 %v1300
        %v1371 = vpop.f32.mrb[0].mxu0
        %v1372 = vadd.f32 %v1291, %v1371
        %v1373 = vpop.f32.mrb[0].mxu0
        %v1374 = vadd.f32 %v1291, %v1373
        %1375 = vmatprep.mubr.f32.mxu0 0.0
        %1376 = vmatmul.mubr.f32.gmra.mrb[0].mxu0 %v1303
        %v1377 = vpop.f32.mrb[0].mxu0
        %v1378 = vadd.f32 %v1296, %v1377
        %v1379 = vpop.f32.mrb[0].mxu0
        %v1380 = vadd.f32 %v1296, %v1379
        %1381 = vdwg.mxu0
        %v1382 = vmul.f32 %v1372, 0.5
        %v1383 = vmul.f32 %v1374, 0.5
        %v1384 = vmul.f32 %v1382, 1.442695
        %v1385 = vpow.pop %v1384
        %v1386 = vmul.f32 %v1383, 1.442695
        %v1387 = vpow.pop %v1386
        %v1388 = vmul.f32 %v515, %v1385
        %v1389 = vmul.f32 %v516, %v1387
        %v1390 = vsub.f32 0.0, %v1388
        %v1391 = vsub.f32 0.0, %v1389
        %v1392 = vmul.f32 %v1378, 0.5
        %v1393 = vmul.f32 %v1380, 0.5
        %v1394 = vadd.f32 %v1390, %v1392
        %v1395 = vadd.f32 %v1391, %v1393
        %v1396 = vmul.f32 %v1394, 3.0
        %v1397 = vmul.f32 %v1395, 3.0
        %v1398 = vsel %vm1172, %v1396, -inf
        %v1399 = vrot.slane %v1398, 4
        %v1400 = vmax.f32 %v1398, %v1399
        %v1401 = vrot.slane %v1400, 2
        %v1402 = vmax.f32 %v1400, %v1401
        %v1403 = vrot.slane %v1402, 1
        %v1404 = vmax.f32 %v1402, %v1403
        %v1405 = vsel %vm1172, %v1397, -inf
        %v1406 = vrot.slane %v1405, 4
        %v1407 = vmax.f32 %v1405, %v1406
        %v1408 = vrot.slane %v1407, 2
        %v1409 = vmax.f32 %v1407, %v1408
        %v1410 = vrot.slane %v1409, 1
        %v1411 = vmax.f32 %v1409, %v1410
        %v1412 = vsub.f32 %v1396, %v1404
        %v1413 = vsub.f32 %v1397, %v1411
        %v1414 = vmul.f32 %v1412, 1.442695
        %v1415 = vpow.pop %v1414
        %v1416 = vmul.f32 %v1413, 1.442695
        %v1417 = vpow.pop %v1416
        %v1418 = vsel %vm1172, %v1415, 0.0
        %v1419 = vrot.slane %v1418, 4
        %v1420 = vadd.f32 %v1418, %v1419
        %v1421 = vrot.slane %v1420, 2
        %v1422 = vadd.f32 %v1420, %v1421
        %v1423 = vrot.slane %v1422, 1
        %v1424 = vadd.f32 %v1422, %v1423
        %v1425 = vsel %vm1172, %v1417, 0.0
        %v1426 = vrot.slane %v1425, 4
        %v1427 = vadd.f32 %v1425, %v1426
        %v1428 = vrot.slane %v1427, 2
        %v1429 = vadd.f32 %v1427, %v1428
        %v1430 = vrot.slane %v1429, 1
        %v1431 = vadd.f32 %v1429, %v1430
        %v1432 = vrcp.pop %v1424
        %v1433 = vrcp.pop %v1431
        %v1434 = vmul.f32 %v1415, %v1432
        %v1435 = vmul.f32 %v1417, %v1433
        %v1438 = vcombine.low %v1434, %v1435
        %1440 = vst [vmem:[%s245] sm:$0xff] %v1438
        %s1441 = sand.u32 %s159, 1
        %s1442 = scalar_lea.sflag [#allocation3], %s1441
        %s1443 = sand.u32 %s159, 1
        %s1444 = smul.addr %s1443, 8
        %s1445 = scalar_lea.vmem [#allocation2], %s1444
        // Predicated region
        $region45: #{tpu_custom_call.1} parent=43 // pred_check
          %p1446 = pneg %p169
        $region46: #{tpu_custom_call.1} parent=43 // pred_check_branch
          %1448 = sbr.rel (%p1446) target = $region48
        $region47: #{tpu_custom_call.1} parent=43 // pred_region
          %s1449 = smul.u32 2, %s20
          %s1451 = ssub.s32 128, 128
          %1452 = vsyncadd %s1442, %s1451
          %s1453 = smul.addr %s1449, 64
          %s1454 = scalar_lea.hbm %s6, %s1453
          %s1456 = sshll.u32 %s1445, 4
          %s1457 = int_to_ptr.vmem [resolvable:$true] %s1456
          %1459 = dma.vmem_to_hbm [thread:$0]  %s1457, 128, %s1454, %s1442
        $region48: #{tpu_custom_call.1} parent=43 // pred_fallthru
          _
      $region44: #{tpu_custom_call.1} parent=5 // pred_fallthru
        _
      %p1460 = scmp.le.s32.totalorder 2, %s15
      // Predicated region
      $region49: #{tpu_custom_call.1} parent=5 // pred_check
        %p1461 = pneg %p1460
      $region50: #{tpu_custom_call.1} parent=5 // pred_check_branch
        %1463 = sbr.rel (%p1461) target = $region52
      $region51: #{tpu_custom_call.1} parent=5 // pred_region
        %s1464 = ssub.s32 %s15, 2
        // Predicated region
        $region53: #{tpu_custom_call.1} parent=51 // pred_check
          %p1465 = pneg %p175
        $region54: #{tpu_custom_call.1} parent=51 // pred_check_branch
          %1467 = sbr.rel (%p1465) target = $region56
        $region55: #{tpu_custom_call.1} parent=51 // pred_region
          %s1468 = sand.u32 %s160, 1
          %s1469 = scalar_lea.sflag [#allocation3], %s1468
          %s1470 = sand.u32 %s160, 1
          %s1471 = smul.addr %s1470, 8
          %s1472 = scalar_lea.vmem [#allocation2], %s1471
          %1473 = dma.done %s1469, 128
        $region56: #{tpu_custom_call.1} parent=51 // pred_fallthru
          _
      $region52: #{tpu_custom_call.1} parent=5 // pred_fallthru
        _
    $region6: #{tpu_custom_call.1} parent=1 // loop_footer
      %s19 = sadd.s32 1, %s15
    $region7: #{tpu_custom_call.1} parent=1 // loop_footer_branch
      %14 = sbr.rel target = $region3
    $region8: #{tpu_custom_call.1} parent=1 // loop_exit
      _
    %1474 = vsyncpa [#allocation3], 1
    %s1475 = scalar_lea.sflag [#allocation3], 1
    %1476 = vsyncpa %s1475, 1

</llo_original>
